<compile_context>
chip_gen: v7x
topology: tpu7x:2x2x1
jax: 0.10.0
libtpu: 0.0.40
codegen_flags: <defaults>
</compile_context>

<pallas_src>
import functools

import jax
import jax.numpy as jnp
from jax import lax
from jax.experimental import pallas as pl
from jax.experimental.pallas import tpu as pltpu


def _round_up(x, m):
    return (x + m - 1) // m * m


# ----------------------------------------------------------------------------
# Fused kernel: all LSTM layers + fc + tanh in a single invocation (no grid).
# Ref layout (after x_ref):
#   [w_ih_0, w_hh_0, b_0, ..., w_ih_{L-1}, w_hh_{L-1}, b_{L-1}, fc_w, fc_b, out]
# ----------------------------------------------------------------------------
def _pinn_kernel(num_layers, hidden_size, x_ref, *refs):
    L, H = num_layers, hidden_size
    layer_refs = [refs[3 * l: 3 * l + 3] for l in range(L)]
    fc_w_ref, fc_b_ref = refs[3 * L], refs[3 * L + 1]
    out_ref = refs[3 * L + 2]

    S, BP, _ = x_ref.shape
    HP = fc_w_ref.shape[0]            # round_up(H, 128)   : padded state width
    GP = layer_refs[0][2].shape[-1]   # round_up(4*H, 128) : packed gate width
    f32 = jnp.float32

    # --- Packed-gate activation constants (hoisted; loop invariant). ---------
    # Lanes [0:H)=i, [H:2H)=f, [2H:3H)=g, [3H:4H)=o, [4H:GP)=zero pad.
    # sigmoid(x) = 0.5 + 0.5*tanh(0.5*x)   (i, f, o lanes)
    # tanh(x)    = 0.0 + 1.0*tanh(1.0*x)   (g lanes)
    lane = lax.broadcasted_iota(jnp.int32, (1, GP), 1)
    is_g = (lane >= 2 * H) & (lane < 3 * H)
    pre = jnp.where(is_g, 1.0, 0.5).astype(f32)
    post = jnp.where(is_g, 0.0, 0.5).astype(f32)

    zero_pad = jnp.zeros((BP, HP - H), f32)   # lane padding used to rebuild h

    # --- Layer 0: batched input projection for ALL timesteps (one MXU matmul,
    #     bias folded in); stays in vregs and is sliced per (static) step. ----
    w_ih0_ref, _, b0_ref = layer_refs[0]
    x_flat = x_ref[...].reshape(S * BP, x_ref.shape[-1])
    xg0 = jnp.dot(x_flat, w_ih0_ref[...],
                  preferred_element_type=f32) + b0_ref[...]
    xg0_steps = [xg0[t * BP:(t + 1) * BP, :] for t in range(S)]   # S x (BP, GP)

    x_steps = None       # per-step inputs for layers >= 1 (the h's of layer l-1)
    h = None
    for l in range(L):
        w_ih_ref, w_hh_ref, b_ref = layer_refs[l]
        w_hh = w_hh_ref[...]                      # hoisted out of the time loop
        if l > 0:
            w_ih = w_ih_ref[...]
            b = b_ref[...]

        h = jnp.zeros((BP, HP), f32)              # zero-padded beyond lane H
        c = jnp.zeros((BP, H), f32)
        next_steps = []
        # Fully unrolled: one basic block, so layer l's step t can overlap with
        # layer l-1's step t+1 (deps allow it now that projections are per-step).
        for t in range(S):
            if l == 0:
                xg_t = xg0_steps[t]
            else:
                xg_t = jnp.dot(x_steps[t], w_ih,
                               preferred_element_type=f32) + b
            gates = xg_t + jnp.dot(h, w_hh, preferred_element_type=f32)  # (BP, GP)
            # Single packed transcendental for all four gates.
            act = pre * jnp.tanh(gates * pre) + post
            i_g = act[:, 0 * H:1 * H]
            f_g = act[:, 1 * H:2 * H]
            g_g = act[:, 2 * H:3 * H]
            o_g = act[:, 3 * H:4 * H]
            c = f_g * c + i_g * g_g                    # (BP, H)
            h_v = o_g * jnp.tanh(c)                    # (BP, H)
            h = jnp.concatenate([h_v, zero_pad], axis=-1)   # exact zero padding
            if l < L - 1:
                next_steps.append(h)
        x_steps = next_steps

    # --- fc + tanh on the final hidden state of the last layer. --------------
    y = jnp.dot(h, fc_w_ref[...], preferred_element_type=f32) + fc_b_ref[...]
    out_ref[...] = jnp.tanh(y)


# ----------------------------------------------------------------------------
# Parameter padding to the packed, lane-aligned layout the kernel expects.
# Gates stay contiguous in PyTorch order [i|f|g|o] at stride H; only the tail
# of the packed-gate axis and the state/input rows are zero-padded.
# ----------------------------------------------------------------------------
def prepare_params(lstm_params, fc_w, fc_b, hidden_size):
    H = hidden_size
    HP = _round_up(H, 128)
    GP = _round_up(4 * H, 128)
    padded = []
    for li, (w_ih, w_hh, b) in enumerate(lstm_params):
        d_in = w_ih.shape[0]
        d_in_pad = d_in if li == 0 else HP     # layer>=1 input is the padded hidden
        w_ih_p = jnp.pad(w_ih, ((0, d_in_pad - d_in), (0, GP - 4 * H)))
        w_hh_p = jnp.pad(w_hh, ((0, HP - H), (0, GP - 4 * H)))
        b_p = jnp.pad(b.reshape(1, 4 * H), ((0, 0), (0, GP - 4 * H)))
        padded.append((w_ih_p, w_hh_p, b_p))
    OUT = fc_w.shape[1]
    OUTP = _round_up(OUT, 128)
    fc_w_p = jnp.pad(fc_w, ((0, HP - H), (0, OUTP - OUT)))
    fc_b_p = jnp.pad(fc_b.reshape(1, OUT), ((0, 0), (0, OUTP - OUT)))
    return padded, fc_w_p, fc_b_p


# ----------------------------------------------------------------------------
# Forward wrapper: one pallas_call, everything VMEM / vreg resident.
# ----------------------------------------------------------------------------
@functools.partial(jax.jit, static_argnames=("hidden_size", "output_size"))
def pinn_forward(x, lstm_params_padded, fc_w_p, fc_b_p, *, hidden_size, output_size):
    B, S, _ = x.shape
    OUTP = fc_w_p.shape[1]
    BP = _round_up(B, 8)
    num_layers = len(lstm_params_padded)

    # batch-first (B,S,Din) -> time-major (S,BP,Din), batch zero-padded.
    x_t = jnp.transpose(x, (1, 0, 2))
    x_t = jnp.pad(x_t, ((0, 0), (0, BP - B), (0, 0)))

    flat_w = []
    for (w_ih, w_hh, b) in lstm_params_padded:
        flat_w += [w_ih, w_hh, b]

    n_in = 1 + len(flat_w) + 2
    in_specs = [pl.BlockSpec(memory_space=pltpu.MemorySpace.VMEM)
                for _ in range(n_in)]

    out = pl.pallas_call(
        functools.partial(_pinn_kernel, num_layers, hidden_size),
        out_shape=jax.ShapeDtypeStruct((BP, OUTP), jnp.float32),
        in_specs=in_specs,
        out_specs=pl.BlockSpec(memory_space=pltpu.MemorySpace.VMEM),
    )(x_t, *flat_w, fc_w_p, fc_b_p)

    return out[:B, :output_size]


# ----------------------------------------------------------------------------
# Pure-JAX reference (correctness check only; uses raw unpadded params).
# ----------------------------------------------------------------------------
def pinn_reference(x, lstm_params, fc_w, fc_b):
    B = x.shape[0]
    inp = x
    for (w_ih, w_hh, bias) in lstm_params:
        H = w_hh.shape[0]

        def step(carry, xt, w_ih=w_ih, w_hh=w_hh, bias=bias, H=H):
            h, c = carry
            gates = xt @ w_ih + h @ w_hh + bias
            i = jax.nn.sigmoid(gates[:, 0 * H:1 * H])
            f = jax.nn.sigmoid(gates[:, 1 * H:2 * H])
            g = jnp.tanh(gates[:, 2 * H:3 * H])
            o = jax.nn.sigmoid(gates[:, 3 * H:4 * H])
            c = f * c + i * g
            h = o * jnp.tanh(c)
            return (h, c), h

        h0 = jnp.zeros((B, H), jnp.float32)
        c0 = jnp.zeros((B, H), jnp.float32)
        (_, _), hs = jax.lax.scan(step, (h0, c0), jnp.transpose(inp, (1, 0, 2)))
        inp = jnp.transpose(hs, (1, 0, 2))
    h_last = inp[:, -1, :]
    return jnp.tanh(h_last @ fc_w + fc_b)


# ----------------------------------------------------------------------------
# Deterministic parameter init (PyTorch-equivalent layout, pre-transposed).
# ----------------------------------------------------------------------------
def make_params(key, input_size, hidden_size, output_size, num_layers):
    lstm_params = []
    scale = 1.0 / jnp.sqrt(hidden_size)
    for layer in range(num_layers):
        d_in = input_size if layer == 0 else hidden_size
        key, k1, k2, k3, k4 = jax.random.split(key, 5)
        w_ih = jax.random.uniform(k1, (d_in, 4 * hidden_size),
                                  minval=-scale, maxval=scale, dtype=jnp.float32)
        w_hh = jax.random.uniform(k2, (hidden_size, 4 * hidden_size),
                                  minval=-scale, maxval=scale, dtype=jnp.float32)
        b_ih = jax.random.uniform(k3, (4 * hidden_size,),
                                  minval=-scale, maxval=scale, dtype=jnp.float32)
        b_hh = jax.random.uniform(k4, (4 * hidden_size,),
                                  minval=-scale, maxval=scale, dtype=jnp.float32)
        lstm_params.append((w_ih, w_hh, b_ih + b_hh))
    key, k5, k6 = jax.random.split(key, 3)
    fc_w = jax.random.uniform(k5, (hidden_size, output_size),
                              minval=-scale, maxval=scale, dtype=jnp.float32)
    fc_b = jax.random.uniform(k6, (output_size,),
                              minval=-scale, maxval=scale, dtype=jnp.float32)
    return lstm_params, fc_w, fc_b


if __name__ == "__main__":
    # Small shapes consistent with the module (INPUT_SIZE == OUTPUT_SIZE).
    BATCH = 4
    SEQ = 8
    INPUT_SIZE = OUTPUT_SIZE = 32
    HIDDEN = 16
    NUM_LAYERS = 2

    key = jax.random.PRNGKey(0)
    key, kx, kp = jax.random.split(key, 3)
    x = jax.random.normal(kx, (BATCH, SEQ, INPUT_SIZE), dtype=jnp.float32)
    lstm_params, fc_w, fc_b = make_params(kp, INPUT_SIZE, HIDDEN,
                                          OUTPUT_SIZE, NUM_LAYERS)

    padded_lstm, fc_w_p, fc_b_p = prepare_params(lstm_params, fc_w, fc_b, HIDDEN)

    out = pinn_forward(x, padded_lstm, fc_w_p, fc_b_p,
                       hidden_size=HIDDEN, output_size=OUTPUT_SIZE)
    out = jax.block_until_ready(out)

    ref = pinn_reference(x, lstm_params, fc_w, fc_b)
    assert out.shape == (BATCH, OUTPUT_SIZE), out.shape
    max_err = float(jnp.max(jnp.abs(out - ref)))
    # Tolerance accounts for the sigmoid-via-tanh reformulation and MXU f32
    # (multi-pass bf16) matmuls; values are O(1) so 1e-4 is a tight f32 check.
    assert jnp.allclose(out, ref, atol=1e-4, rtol=1e-4), max_err

    print("KERNEL_OK")
</pallas_src>

<mosaic_0001>
module attributes {stable_mosaic.version = 11 : i64} {
  func.func @_pinn_kernel(%arg0: memref<8x8x32xf32, #tpu.memory_space<vmem>>, %arg1: memref<32x128xf32, #tpu.memory_space<vmem>>, %arg2: memref<128x128xf32, #tpu.memory_space<vmem>>, %arg3: memref<1x128xf32, #tpu.memory_space<vmem>>, %arg4: memref<128x128xf32, #tpu.memory_space<vmem>>, %arg5: memref<128x128xf32, #tpu.memory_space<vmem>>, %arg6: memref<1x128xf32, #tpu.memory_space<vmem>>, %arg7: memref<128x128xf32, #tpu.memory_space<vmem>>, %arg8: memref<1x128xf32, #tpu.memory_space<vmem>>, %arg9: memref<8x128xf32, #tpu.memory_space<vmem>>) attributes {dimension_semantics = [], scalar_prefetch = 0 : i64, scratch_operands = 0 : i64, tpu.core_type = #tpu.core_type<tc>} {
    %0 = tpu.iota {dimensions = array<i32: 1>} : vector<1x128xi32>
    %c32_i32 = arith.constant 32 : i32
    %1 = vector.broadcast %c32_i32 : i32 to vector<1x128xi32>
    %2 = arith.cmpi sge, %0, %1 : vector<1x128xi32>
    %c48_i32 = arith.constant 48 : i32
    %3 = vector.broadcast %c48_i32 : i32 to vector<1x128xi32>
    %4 = arith.cmpi slt, %0, %3 : vector<1x128xi32>
    %5 = arith.andi %2, %4 : vector<1x128xi1>
    %cst = arith.constant 1.000000e+00 : f32
    %cst_0 = arith.constant 5.000000e-01 : f32
    %6 = vector.broadcast %cst : f32 to vector<1x128xf32>
    %7 = vector.broadcast %cst_0 : f32 to vector<1x128xf32>
    %8 = arith.select %5, %6, %7 : vector<1x128xi1>, vector<1x128xf32>
    %cst_1 = arith.constant 0.000000e+00 : f32
    %cst_2 = arith.constant 5.000000e-01 : f32
    %9 = vector.broadcast %cst_1 : f32 to vector<1x128xf32>
    %10 = vector.broadcast %cst_2 : f32 to vector<1x128xf32>
    %11 = arith.select %5, %9, %10 : vector<1x128xi1>, vector<1x128xf32>
    %cst_3 = arith.constant 0.000000e+00 : f32
    %12 = vector.broadcast %cst_3 : f32 to vector<8x112xf32>
    %c0 = arith.constant 0 : index
    %c0_4 = arith.constant 0 : index
    %c0_5 = arith.constant 0 : index
    %13 = vector.load %arg0[%c0, %c0_4, %c0_5] : memref<8x8x32xf32, #tpu.memory_space<vmem>>, vector<8x8x32xf32>
    %14 = vector.shape_cast %13 : vector<8x8x32xf32> to vector<64x32xf32>
    %c0_6 = arith.constant 0 : index
    %c0_7 = arith.constant 0 : index
    %15 = vector.load %arg1[%c0_6, %c0_7] : memref<32x128xf32, #tpu.memory_space<vmem>>, vector<32x128xf32>
    %cst_8 = arith.constant dense<0.000000e+00> : vector<64x128xf32>
    %16 = tpu.matmul %14, %15, %cst_8 {dimension_numbers = #tpu.dot_dimension_numbers<[1], [0], [0], [1], [0, 0, 1, 1], [], []>} : vector<64x32xf32>, vector<32x128xf32>, vector<64x128xf32> -> vector<64x128xf32>
    %c0_9 = arith.constant 0 : index
    %c0_10 = arith.constant 0 : index
    %17 = vector.load %arg3[%c0_9, %c0_10] : memref<1x128xf32, #tpu.memory_space<vmem>>, vector<1x128xf32>
    %18 = vector.broadcast %17 : vector<1x128xf32> to vector<64x128xf32>
    %19 = arith.addf %16, %18 : vector<64x128xf32>
    %20 = vector.extract_strided_slice %19 {offsets = [0, 0], sizes = [8, 128], strides = [1, 1]} : vector<64x128xf32> to vector<8x128xf32>
    %21 = vector.extract_strided_slice %19 {offsets = [8, 0], sizes = [8, 128], strides = [1, 1]} : vector<64x128xf32> to vector<8x128xf32>
    %22 = vector.extract_strided_slice %19 {offsets = [16, 0], sizes = [8, 128], strides = [1, 1]} : vector<64x128xf32> to vector<8x128xf32>
    %23 = vector.extract_strided_slice %19 {offsets = [24, 0], sizes = [8, 128], strides = [1, 1]} : vector<64x128xf32> to vector<8x128xf32>
    %24 = vector.extract_strided_slice %19 {offsets = [32, 0], sizes = [8, 128], strides = [1, 1]} : vector<64x128xf32> to vector<8x128xf32>
    %25 = vector.extract_strided_slice %19 {offsets = [40, 0], sizes = [8, 128], strides = [1, 1]} : vector<64x128xf32> to vector<8x128xf32>
    %26 = vector.extract_strided_slice %19 {offsets = [48, 0], sizes = [8, 128], strides = [1, 1]} : vector<64x128xf32> to vector<8x128xf32>
    %27 = vector.extract_strided_slice %19 {offsets = [56, 0], sizes = [8, 128], strides = [1, 1]} : vector<64x128xf32> to vector<8x128xf32>
    %c0_11 = arith.constant 0 : index
    %c0_12 = arith.constant 0 : index
    %28 = vector.load %arg2[%c0_11, %c0_12] : memref<128x128xf32, #tpu.memory_space<vmem>>, vector<128x128xf32>
    %cst_13 = arith.constant 0.000000e+00 : f32
    %29 = vector.broadcast %cst_13 : f32 to vector<8x128xf32>
    %cst_14 = arith.constant 0.000000e+00 : f32
    %30 = vector.broadcast %cst_14 : f32 to vector<8x16xf32>
    %cst_15 = arith.constant dense<0.000000e+00> : vector<8x128xf32>
    %31 = tpu.matmul %29, %28, %cst_15 {dimension_numbers = #tpu.dot_dimension_numbers<[1], [0], [0], [1], [0, 0, 1, 1], [], []>} : vector<8x128xf32>, vector<128x128xf32>, vector<8x128xf32> -> vector<8x128xf32>
    %32 = arith.addf %20, %31 : vector<8x128xf32>
    %33 = vector.broadcast %8 : vector<1x128xf32> to vector<8x128xf32>
    %34 = arith.mulf %32, %33 : vector<8x128xf32>
    %35 = math.tanh %34 : vector<8x128xf32>
    %36 = vector.broadcast %8 : vector<1x128xf32> to vector<8x128xf32>
    %37 = arith.mulf %36, %35 : vector<8x128xf32>
    %38 = vector.broadcast %11 : vector<1x128xf32> to vector<8x128xf32>
    %39 = arith.addf %37, %38 : vector<8x128xf32>
    %40 = vector.extract_strided_slice %39 {offsets = [0, 0], sizes = [8, 16], strides = [1, 1]} : vector<8x128xf32> to vector<8x16xf32>
    %41 = vector.extract_strided_slice %39 {offsets = [0, 16], sizes = [8, 16], strides = [1, 1]} : vector<8x128xf32> to vector<8x16xf32>
    %42 = vector.extract_strided_slice %39 {offsets = [0, 32], sizes = [8, 16], strides = [1, 1]} : vector<8x128xf32> to vector<8x16xf32>
    %43 = vector.extract_strided_slice %39 {offsets = [0, 48], sizes = [8, 16], strides = [1, 1]} : vector<8x128xf32> to vector<8x16xf32>
    %44 = arith.mulf %41, %30 : vector<8x16xf32>
    %45 = arith.mulf %40, %42 : vector<8x16xf32>
    %46 = arith.addf %44, %45 : vector<8x16xf32>
    %47 = math.tanh %46 : vector<8x16xf32>
    %48 = arith.mulf %43, %47 : vector<8x16xf32>
    %49 = tpu.concatenate %48, %12 in 1 : vector<8x16xf32>, vector<8x112xf32> -> vector<8x128xf32>
    %cst_16 = arith.constant dense<0.000000e+00> : vector<8x128xf32>
    %50 = tpu.matmul %49, %28, %cst_16 {dimension_numbers = #tpu.dot_dimension_numbers<[1], [0], [0], [1], [0, 0, 1, 1], [], []>} : vector<8x128xf32>, vector<128x128xf32>, vector<8x128xf32> -> vector<8x128xf32>
    %51 = arith.addf %21, %50 : vector<8x128xf32>
    %52 = vector.broadcast %8 : vector<1x128xf32> to vector<8x128xf32>
    %53 = arith.mulf %51, %52 : vector<8x128xf32>
    %54 = math.tanh %53 : vector<8x128xf32>
    %55 = vector.broadcast %8 : vector<1x128xf32> to vector<8x128xf32>
    %56 = arith.mulf %55, %54 : vector<8x128xf32>
    %57 = vector.broadcast %11 : vector<1x128xf32> to vector<8x128xf32>
    %58 = arith.addf %56, %57 : vector<8x128xf32>
    %59 = vector.extract_strided_slice %58 {offsets = [0, 0], sizes = [8, 16], strides = [1, 1]} : vector<8x128xf32> to vector<8x16xf32>
    %60 = vector.extract_strided_slice %58 {offsets = [0, 16], sizes = [8, 16], strides = [1, 1]} : vector<8x128xf32> to vector<8x16xf32>
    %61 = vector.extract_strided_slice %58 {offsets = [0, 32], sizes = [8, 16], strides = [1, 1]} : vector<8x128xf32> to vector<8x16xf32>
    %62 = vector.extract_strided_slice %58 {offsets = [0, 48], sizes = [8, 16], strides = [1, 1]} : vector<8x128xf32> to vector<8x16xf32>
    %63 = arith.mulf %60, %46 : vector<8x16xf32>
    %64 = arith.mulf %59, %61 : vector<8x16xf32>
    %65 = arith.addf %63, %64 : vector<8x16xf32>
    %66 = math.tanh %65 : vector<8x16xf32>
    %67 = arith.mulf %62, %66 : vector<8x16xf32>
    %68 = tpu.concatenate %67, %12 in 1 : vector<8x16xf32>, vector<8x112xf32> -> vector<8x128xf32>
    %cst_17 = arith.constant dense<0.000000e+00> : vector<8x128xf32>
    %69 = tpu.matmul %68, %28, %cst_17 {dimension_numbers = #tpu.dot_dimension_numbers<[1], [0], [0], [1], [0, 0, 1, 1], [], []>} : vector<8x128xf32>, vector<128x128xf32>, vector<8x128xf32> -> vector<8x128xf32>
    %70 = arith.addf %22, %69 : vector<8x128xf32>
    %71 = vector.broadcast %8 : vector<1x128xf32> to vector<8x128xf32>
    %72 = arith.mulf %70, %71 : vector<8x128xf32>
    %73 = math.tanh %72 : vector<8x128xf32>
    %74 = vector.broadcast %8 : vector<1x128xf32> to vector<8x128xf32>
    %75 = arith.mulf %74, %73 : vector<8x128xf32>
    %76 = vector.broadcast %11 : vector<1x128xf32> to vector<8x128xf32>
    %77 = arith.addf %75, %76 : vector<8x128xf32>
    %78 = vector.extract_strided_slice %77 {offsets = [0, 0], sizes = [8, 16], strides = [1, 1]} : vector<8x128xf32> to vector<8x16xf32>
    %79 = vector.extract_strided_slice %77 {offsets = [0, 16], sizes = [8, 16], strides = [1, 1]} : vector<8x128xf32> to vector<8x16xf32>
    %80 = vector.extract_strided_slice %77 {offsets = [0, 32], sizes = [8, 16], strides = [1, 1]} : vector<8x128xf32> to vector<8x16xf32>
    %81 = vector.extract_strided_slice %77 {offsets = [0, 48], sizes = [8, 16], strides = [1, 1]} : vector<8x128xf32> to vector<8x16xf32>
    %82 = arith.mulf %79, %65 : vector<8x16xf32>
    %83 = arith.mulf %78, %80 : vector<8x16xf32>
    %84 = arith.addf %82, %83 : vector<8x16xf32>
    %85 = math.tanh %84 : vector<8x16xf32>
    %86 = arith.mulf %81, %85 : vector<8x16xf32>
    %87 = tpu.concatenate %86, %12 in 1 : vector<8x16xf32>, vector<8x112xf32> -> vector<8x128xf32>
    %cst_18 = arith.constant dense<0.000000e+00> : vector<8x128xf32>
    %88 = tpu.matmul %87, %28, %cst_18 {dimension_numbers = #tpu.dot_dimension_numbers<[1], [0], [0], [1], [0, 0, 1, 1], [], []>} : vector<8x128xf32>, vector<128x128xf32>, vector<8x128xf32> -> vector<8x128xf32>
    %89 = arith.addf %23, %88 : vector<8x128xf32>
    %90 = vector.broadcast %8 : vector<1x128xf32> to vector<8x128xf32>
    %91 = arith.mulf %89, %90 : vector<8x128xf32>
    %92 = math.tanh %91 : vector<8x128xf32>
    %93 = vector.broadcast %8 : vector<1x128xf32> to vector<8x128xf32>
    %94 = arith.mulf %93, %92 : vector<8x128xf32>
    %95 = vector.broadcast %11 : vector<1x128xf32> to vector<8x128xf32>
    %96 = arith.addf %94, %95 : vector<8x128xf32>
    %97 = vector.extract_strided_slice %96 {offsets = [0, 0], sizes = [8, 16], strides = [1, 1]} : vector<8x128xf32> to vector<8x16xf32>
    %98 = vector.extract_strided_slice %96 {offsets = [0, 16], sizes = [8, 16], strides = [1, 1]} : vector<8x128xf32> to vector<8x16xf32>
    %99 = vector.extract_strided_slice %96 {offsets = [0, 32], sizes = [8, 16], strides = [1, 1]} : vector<8x128xf32> to vector<8x16xf32>
    %100 = vector.extract_strided_slice %96 {offsets = [0, 48], sizes = [8, 16], strides = [1, 1]} : vector<8x128xf32> to vector<8x16xf32>
    %101 = arith.mulf %98, %84 : vector<8x16xf32>
    %102 = arith.mulf %97, %99 : vector<8x16xf32>
    %103 = arith.addf %101, %102 : vector<8x16xf32>
    %104 = math.tanh %103 : vector<8x16xf32>
    %105 = arith.mulf %100, %104 : vector<8x16xf32>
    %106 = tpu.concatenate %105, %12 in 1 : vector<8x16xf32>, vector<8x112xf32> -> vector<8x128xf32>
    %cst_19 = arith.constant dense<0.000000e+00> : vector<8x128xf32>
    %107 = tpu.matmul %106, %28, %cst_19 {dimension_numbers = #tpu.dot_dimension_numbers<[1], [0], [0], [1], [0, 0, 1, 1], [], []>} : vector<8x128xf32>, vector<128x128xf32>, vector<8x128xf32> -> vector<8x128xf32>
    %108 = arith.addf %24, %107 : vector<8x128xf32>
    %109 = vector.broadcast %8 : vector<1x128xf32> to vector<8x128xf32>
    %110 = arith.mulf %108, %109 : vector<8x128xf32>
    %111 = math.tanh %110 : vector<8x128xf32>
    %112 = vector.broadcast %8 : vector<1x128xf32> to vector<8x128xf32>
    %113 = arith.mulf %112, %111 : vector<8x128xf32>
    %114 = vector.broadcast %11 : vector<1x128xf32> to vector<8x128xf32>
    %115 = arith.addf %113, %114 : vector<8x128xf32>
    %116 = vector.extract_strided_slice %115 {offsets = [0, 0], sizes = [8, 16], strides = [1, 1]} : vector<8x128xf32> to vector<8x16xf32>
    %117 = vector.extract_strided_slice %115 {offsets = [0, 16], sizes = [8, 16], strides = [1, 1]} : vector<8x128xf32> to vector<8x16xf32>
    %118 = vector.extract_strided_slice %115 {offsets = [0, 32], sizes = [8, 16], strides = [1, 1]} : vector<8x128xf32> to vector<8x16xf32>
    %119 = vector.extract_strided_slice %115 {offsets = [0, 48], sizes = [8, 16], strides = [1, 1]} : vector<8x128xf32> to vector<8x16xf32>
    %120 = arith.mulf %117, %103 : vector<8x16xf32>
    %121 = arith.mulf %116, %118 : vector<8x16xf32>
    %122 = arith.addf %120, %121 : vector<8x16xf32>
    %123 = math.tanh %122 : vector<8x16xf32>
    %124 = arith.mulf %119, %123 : vector<8x16xf32>
    %125 = tpu.concatenate %124, %12 in 1 : vector<8x16xf32>, vector<8x112xf32> -> vector<8x128xf32>
    %cst_20 = arith.constant dense<0.000000e+00> : vector<8x128xf32>
    %126 = tpu.matmul %125, %28, %cst_20 {dimension_numbers = #tpu.dot_dimension_numbers<[1], [0], [0], [1], [0, 0, 1, 1], [], []>} : vector<8x128xf32>, vector<128x128xf32>, vector<8x128xf32> -> vector<8x128xf32>
    %127 = arith.addf %25, %126 : vector<8x128xf32>
    %128 = vector.broadcast %8 : vector<1x128xf32> to vector<8x128xf32>
    %129 = arith.mulf %127, %128 : vector<8x128xf32>
    %130 = math.tanh %129 : vector<8x128xf32>
    %131 = vector.broadcast %8 : vector<1x128xf32> to vector<8x128xf32>
    %132 = arith.mulf %131, %130 : vector<8x128xf32>
    %133 = vector.broadcast %11 : vector<1x128xf32> to vector<8x128xf32>
    %134 = arith.addf %132, %133 : vector<8x128xf32>
    %135 = vector.extract_strided_slice %134 {offsets = [0, 0], sizes = [8, 16], strides = [1, 1]} : vector<8x128xf32> to vector<8x16xf32>
    %136 = vector.extract_strided_slice %134 {offsets = [0, 16], sizes = [8, 16], strides = [1, 1]} : vector<8x128xf32> to vector<8x16xf32>
    %137 = vector.extract_strided_slice %134 {offsets = [0, 32], sizes = [8, 16], strides = [1, 1]} : vector<8x128xf32> to vector<8x16xf32>
    %138 = vector.extract_strided_slice %134 {offsets = [0, 48], sizes = [8, 16], strides = [1, 1]} : vector<8x128xf32> to vector<8x16xf32>
    %139 = arith.mulf %136, %122 : vector<8x16xf32>
    %140 = arith.mulf %135, %137 : vector<8x16xf32>
    %141 = arith.addf %139, %140 : vector<8x16xf32>
    %142 = math.tanh %141 : vector<8x16xf32>
    %143 = arith.mulf %138, %142 : vector<8x16xf32>
    %144 = tpu.concatenate %143, %12 in 1 : vector<8x16xf32>, vector<8x112xf32> -> vector<8x128xf32>
    %cst_21 = arith.constant dense<0.000000e+00> : vector<8x128xf32>
    %145 = tpu.matmul %144, %28, %cst_21 {dimension_numbers = #tpu.dot_dimension_numbers<[1], [0], [0], [1], [0, 0, 1, 1], [], []>} : vector<8x128xf32>, vector<128x128xf32>, vector<8x128xf32> -> vector<8x128xf32>
    %146 = arith.addf %26, %145 : vector<8x128xf32>
    %147 = vector.broadcast %8 : vector<1x128xf32> to vector<8x128xf32>
    %148 = arith.mulf %146, %147 : vector<8x128xf32>
    %149 = math.tanh %148 : vector<8x128xf32>
    %150 = vector.broadcast %8 : vector<1x128xf32> to vector<8x128xf32>
    %151 = arith.mulf %150, %149 : vector<8x128xf32>
    %152 = vector.broadcast %11 : vector<1x128xf32> to vector<8x128xf32>
    %153 = arith.addf %151, %152 : vector<8x128xf32>
    %154 = vector.extract_strided_slice %153 {offsets = [0, 0], sizes = [8, 16], strides = [1, 1]} : vector<8x128xf32> to vector<8x16xf32>
    %155 = vector.extract_strided_slice %153 {offsets = [0, 16], sizes = [8, 16], strides = [1, 1]} : vector<8x128xf32> to vector<8x16xf32>
    %156 = vector.extract_strided_slice %153 {offsets = [0, 32], sizes = [8, 16], strides = [1, 1]} : vector<8x128xf32> to vector<8x16xf32>
    %157 = vector.extract_strided_slice %153 {offsets = [0, 48], sizes = [8, 16], strides = [1, 1]} : vector<8x128xf32> to vector<8x16xf32>
    %158 = arith.mulf %155, %141 : vector<8x16xf32>
    %159 = arith.mulf %154, %156 : vector<8x16xf32>
    %160 = arith.addf %158, %159 : vector<8x16xf32>
    %161 = math.tanh %160 : vector<8x16xf32>
    %162 = arith.mulf %157, %161 : vector<8x16xf32>
    %163 = tpu.concatenate %162, %12 in 1 : vector<8x16xf32>, vector<8x112xf32> -> vector<8x128xf32>
    %cst_22 = arith.constant dense<0.000000e+00> : vector<8x128xf32>
    %164 = tpu.matmul %163, %28, %cst_22 {dimension_numbers = #tpu.dot_dimension_numbers<[1], [0], [0], [1], [0, 0, 1, 1], [], []>} : vector<8x128xf32>, vector<128x128xf32>, vector<8x128xf32> -> vector<8x128xf32>
    %165 = arith.addf %27, %164 : vector<8x128xf32>
    %166 = vector.broadcast %8 : vector<1x128xf32> to vector<8x128xf32>
    %167 = arith.mulf %165, %166 : vector<8x128xf32>
    %168 = math.tanh %167 : vector<8x128xf32>
    %169 = vector.broadcast %8 : vector<1x128xf32> to vector<8x128xf32>
    %170 = arith.mulf %169, %168 : vector<8x128xf32>
    %171 = vector.broadcast %11 : vector<1x128xf32> to vector<8x128xf32>
    %172 = arith.addf %170, %171 : vector<8x128xf32>
    %173 = vector.extract_strided_slice %172 {offsets = [0, 0], sizes = [8, 16], strides = [1, 1]} : vector<8x128xf32> to vector<8x16xf32>
    %174 = vector.extract_strided_slice %172 {offsets = [0, 16], sizes = [8, 16], strides = [1, 1]} : vector<8x128xf32> to vector<8x16xf32>
    %175 = vector.extract_strided_slice %172 {offsets = [0, 32], sizes = [8, 16], strides = [1, 1]} : vector<8x128xf32> to vector<8x16xf32>
    %176 = vector.extract_strided_slice %172 {offsets = [0, 48], sizes = [8, 16], strides = [1, 1]} : vector<8x128xf32> to vector<8x16xf32>
    %177 = arith.mulf %174, %160 : vector<8x16xf32>
    %178 = arith.mulf %173, %175 : vector<8x16xf32>
    %179 = arith.addf %177, %178 : vector<8x16xf32>
    %180 = math.tanh %179 : vector<8x16xf32>
    %181 = arith.mulf %176, %180 : vector<8x16xf32>
    %182 = tpu.concatenate %181, %12 in 1 : vector<8x16xf32>, vector<8x112xf32> -> vector<8x128xf32>
    %c0_23 = arith.constant 0 : index
    %c0_24 = arith.constant 0 : index
    %183 = vector.load %arg5[%c0_23, %c0_24] : memref<128x128xf32, #tpu.memory_space<vmem>>, vector<128x128xf32>
    %c0_25 = arith.constant 0 : index
    %c0_26 = arith.constant 0 : index
    %184 = vector.load %arg4[%c0_25, %c0_26] : memref<128x128xf32, #tpu.memory_space<vmem>>, vector<128x128xf32>
    %c0_27 = arith.constant 0 : index
    %c0_28 = arith.constant 0 : index
    %185 = vector.load %arg6[%c0_27, %c0_28] : memref<1x128xf32, #tpu.memory_space<vmem>>, vector<1x128xf32>
    %cst_29 = arith.constant 0.000000e+00 : f32
    %186 = vector.broadcast %cst_29 : f32 to vector<8x128xf32>
    %cst_30 = arith.constant 0.000000e+00 : f32
    %187 = vector.broadcast %cst_30 : f32 to vector<8x16xf32>
    %cst_31 = arith.constant dense<0.000000e+00> : vector<8x128xf32>
    %188 = tpu.matmul %49, %184, %cst_31 {dimension_numbers = #tpu.dot_dimension_numbers<[1], [0], [0], [1], [0, 0, 1, 1], [], []>} : vector<8x128xf32>, vector<128x128xf32>, vector<8x128xf32> -> vector<8x128xf32>
    %189 = vector.broadcast %185 : vector<1x128xf32> to vector<8x128xf32>
    %190 = arith.addf %188, %189 : vector<8x128xf32>
    %cst_32 = arith.constant dense<0.000000e+00> : vector<8x128xf32>
    %191 = tpu.matmul %186, %183, %cst_32 {dimension_numbers = #tpu.dot_dimension_numbers<[1], [0], [0], [1], [0, 0, 1, 1], [], []>} : vector<8x128xf32>, vector<128x128xf32>, vector<8x128xf32> -> vector<8x128xf32>
    %192 = arith.addf %190, %191 : vector<8x128xf32>
    %193 = vector.broadcast %8 : vector<1x128xf32> to vector<8x128xf32>
    %194 = arith.mulf %192, %193 : vector<8x128xf32>
    %195 = math.tanh %194 : vector<8x128xf32>
    %196 = vector.broadcast %8 : vector<1x128xf32> to vector<8x128xf32>
    %197 = arith.mulf %196, %195 : vector<8x128xf32>
    %198 = vector.broadcast %11 : vector<1x128xf32> to vector<8x128xf32>
    %199 = arith.addf %197, %198 : vector<8x128xf32>
    %200 = vector.extract_strided_slice %199 {offsets = [0, 0], sizes = [8, 16], strides = [1, 1]} : vector<8x128xf32> to vector<8x16xf32>
    %201 = vector.extract_strided_slice %199 {offsets = [0, 16], sizes = [8, 16], strides = [1, 1]} : vector<8x128xf32> to vector<8x16xf32>
    %202 = vector.extract_strided_slice %199 {offsets = [0, 32], sizes = [8, 16], strides = [1, 1]} : vector<8x128xf32> to vector<8x16xf32>
    %203 = vector.extract_strided_slice %199 {offsets = [0, 48], sizes = [8, 16], strides = [1, 1]} : vector<8x128xf32> to vector<8x16xf32>
    %204 = arith.mulf %201, %187 : vector<8x16xf32>
    %205 = arith.mulf %200, %202 : vector<8x16xf32>
    %206 = arith.addf %204, %205 : vector<8x16xf32>
    %207 = math.tanh %206 : vector<8x16xf32>
    %208 = arith.mulf %203, %207 : vector<8x16xf32>
    %209 = tpu.concatenate %208, %12 in 1 : vector<8x16xf32>, vector<8x112xf32> -> vector<8x128xf32>
    %cst_33 = arith.constant dense<0.000000e+00> : vector<8x128xf32>
    %210 = tpu.matmul %68, %184, %cst_33 {dimension_numbers = #tpu.dot_dimension_numbers<[1], [0], [0], [1], [0, 0, 1, 1], [], []>} : vector<8x128xf32>, vector<128x128xf32>, vector<8x128xf32> -> vector<8x128xf32>
    %211 = vector.broadcast %185 : vector<1x128xf32> to vector<8x128xf32>
    %212 = arith.addf %210, %211 : vector<8x128xf32>
    %cst_34 = arith.constant dense<0.000000e+00> : vector<8x128xf32>
    %213 = tpu.matmul %209, %183, %cst_34 {dimension_numbers = #tpu.dot_dimension_numbers<[1], [0], [0], [1], [0, 0, 1, 1], [], []>} : vector<8x128xf32>, vector<128x128xf32>, vector<8x128xf32> -> vector<8x128xf32>
    %214 = arith.addf %212, %213 : vector<8x128xf32>
    %215 = vector.broadcast %8 : vector<1x128xf32> to vector<8x128xf32>
    %216 = arith.mulf %214, %215 : vector<8x128xf32>
    %217 = math.tanh %216 : vector<8x128xf32>
    %218 = vector.broadcast %8 : vector<1x128xf32> to vector<8x128xf32>
    %219 = arith.mulf %218, %217 : vector<8x128xf32>
    %220 = vector.broadcast %11 : vector<1x128xf32> to vector<8x128xf32>
    %221 = arith.addf %219, %220 : vector<8x128xf32>
    %222 = vector.extract_strided_slice %221 {offsets = [0, 0], sizes = [8, 16], strides = [1, 1]} : vector<8x128xf32> to vector<8x16xf32>
    %223 = vector.extract_strided_slice %221 {offsets = [0, 16], sizes = [8, 16], strides = [1, 1]} : vector<8x128xf32> to vector<8x16xf32>
    %224 = vector.extract_strided_slice %221 {offsets = [0, 32], sizes = [8, 16], strides = [1, 1]} : vector<8x128xf32> to vector<8x16xf32>
    %225 = vector.extract_strided_slice %221 {offsets = [0, 48], sizes = [8, 16], strides = [1, 1]} : vector<8x128xf32> to vector<8x16xf32>
    %226 = arith.mulf %223, %206 : vector<8x16xf32>
    %227 = arith.mulf %222, %224 : vector<8x16xf32>
    %228 = arith.addf %226, %227 : vector<8x16xf32>
    %229 = math.tanh %228 : vector<8x16xf32>
    %230 = arith.mulf %225, %229 : vector<8x16xf32>
    %231 = tpu.concatenate %230, %12 in 1 : vector<8x16xf32>, vector<8x112xf32> -> vector<8x128xf32>
    %cst_35 = arith.constant dense<0.000000e+00> : vector<8x128xf32>
    %232 = tpu.matmul %87, %184, %cst_35 {dimension_numbers = #tpu.dot_dimension_numbers<[1], [0], [0], [1], [0, 0, 1, 1], [], []>} : vector<8x128xf32>, vector<128x128xf32>, vector<8x128xf32> -> vector<8x128xf32>
    %233 = vector.broadcast %185 : vector<1x128xf32> to vector<8x128xf32>
    %234 = arith.addf %232, %233 : vector<8x128xf32>
    %cst_36 = arith.constant dense<0.000000e+00> : vector<8x128xf32>
    %235 = tpu.matmul %231, %183, %cst_36 {dimension_numbers = #tpu.dot_dimension_numbers<[1], [0], [0], [1], [0, 0, 1, 1], [], []>} : vector<8x128xf32>, vector<128x128xf32>, vector<8x128xf32> -> vector<8x128xf32>
    %236 = arith.addf %234, %235 : vector<8x128xf32>
    %237 = vector.broadcast %8 : vector<1x128xf32> to vector<8x128xf32>
    %238 = arith.mulf %236, %237 : vector<8x128xf32>
    %239 = math.tanh %238 : vector<8x128xf32>
    %240 = vector.broadcast %8 : vector<1x128xf32> to vector<8x128xf32>
    %241 = arith.mulf %240, %239 : vector<8x128xf32>
    %242 = vector.broadcast %11 : vector<1x128xf32> to vector<8x128xf32>
    %243 = arith.addf %241, %242 : vector<8x128xf32>
    %244 = vector.extract_strided_slice %243 {offsets = [0, 0], sizes = [8, 16], strides = [1, 1]} : vector<8x128xf32> to vector<8x16xf32>
    %245 = vector.extract_strided_slice %243 {offsets = [0, 16], sizes = [8, 16], strides = [1, 1]} : vector<8x128xf32> to vector<8x16xf32>
    %246 = vector.extract_strided_slice %243 {offsets = [0, 32], sizes = [8, 16], strides = [1, 1]} : vector<8x128xf32> to vector<8x16xf32>
    %247 = vector.extract_strided_slice %243 {offsets = [0, 48], sizes = [8, 16], strides = [1, 1]} : vector<8x128xf32> to vector<8x16xf32>
    %248 = arith.mulf %245, %228 : vector<8x16xf32>
    %249 = arith.mulf %244, %246 : vector<8x16xf32>
    %250 = arith.addf %248, %249 : vector<8x16xf32>
    %251 = math.tanh %250 : vector<8x16xf32>
    %252 = arith.mulf %247, %251 : vector<8x16xf32>
    %253 = tpu.concatenate %252, %12 in 1 : vector<8x16xf32>, vector<8x112xf32> -> vector<8x128xf32>
    %cst_37 = arith.constant dense<0.000000e+00> : vector<8x128xf32>
    %254 = tpu.matmul %106, %184, %cst_37 {dimension_numbers = #tpu.dot_dimension_numbers<[1], [0], [0], [1], [0, 0, 1, 1], [], []>} : vector<8x128xf32>, vector<128x128xf32>, vector<8x128xf32> -> vector<8x128xf32>
    %255 = vector.broadcast %185 : vector<1x128xf32> to vector<8x128xf32>
    %256 = arith.addf %254, %255 : vector<8x128xf32>
    %cst_38 = arith.constant dense<0.000000e+00> : vector<8x128xf32>
    %257 = tpu.matmul %253, %183, %cst_38 {dimension_numbers = #tpu.dot_dimension_numbers<[1], [0], [0], [1], [0, 0, 1, 1], [], []>} : vector<8x128xf32>, vector<128x128xf32>, vector<8x128xf32> -> vector<8x128xf32>
    %258 = arith.addf %256, %257 : vector<8x128xf32>
    %259 = vector.broadcast %8 : vector<1x128xf32> to vector<8x128xf32>
    %260 = arith.mulf %258, %259 : vector<8x128xf32>
    %261 = math.tanh %260 : vector<8x128xf32>
    %262 = vector.broadcast %8 : vector<1x128xf32> to vector<8x128xf32>
    %263 = arith.mulf %262, %261 : vector<8x128xf32>
    %264 = vector.broadcast %11 : vector<1x128xf32> to vector<8x128xf32>
    %265 = arith.addf %263, %264 : vector<8x128xf32>
    %266 = vector.extract_strided_slice %265 {offsets = [0, 0], sizes = [8, 16], strides = [1, 1]} : vector<8x128xf32> to vector<8x16xf32>
    %267 = vector.extract_strided_slice %265 {offsets = [0, 16], sizes = [8, 16], strides = [1, 1]} : vector<8x128xf32> to vector<8x16xf32>
    %268 = vector.extract_strided_slice %265 {offsets = [0, 32], sizes = [8, 16], strides = [1, 1]} : vector<8x128xf32> to vector<8x16xf32>
    %269 = vector.extract_strided_slice %265 {offsets = [0, 48], sizes = [8, 16], strides = [1, 1]} : vector<8x128xf32> to vector<8x16xf32>
    %270 = arith.mulf %267, %250 : vector<8x16xf32>
    %271 = arith.mulf %266, %268 : vector<8x16xf32>
    %272 = arith.addf %270, %271 : vector<8x16xf32>
    %273 = math.tanh %272 : vector<8x16xf32>
    %274 = arith.mulf %269, %273 : vector<8x16xf32>
    %275 = tpu.concatenate %274, %12 in 1 : vector<8x16xf32>, vector<8x112xf32> -> vector<8x128xf32>
    %cst_39 = arith.constant dense<0.000000e+00> : vector<8x128xf32>
    %276 = tpu.matmul %125, %184, %cst_39 {dimension_numbers = #tpu.dot_dimension_numbers<[1], [0], [0], [1], [0, 0, 1, 1], [], []>} : vector<8x128xf32>, vector<128x128xf32>, vector<8x128xf32> -> vector<8x128xf32>
    %277 = vector.broadcast %185 : vector<1x128xf32> to vector<8x128xf32>
    %278 = arith.addf %276, %277 : vector<8x128xf32>
    %cst_40 = arith.constant dense<0.000000e+00> : vector<8x128xf32>
    %279 = tpu.matmul %275, %183, %cst_40 {dimension_numbers = #tpu.dot_dimension_numbers<[1], [0], [0], [1], [0, 0, 1, 1], [], []>} : vector<8x128xf32>, vector<128x128xf32>, vector<8x128xf32> -> vector<8x128xf32>
    %280 = arith.addf %278, %279 : vector<8x128xf32>
    %281 = vector.broadcast %8 : vector<1x128xf32> to vector<8x128xf32>
    %282 = arith.mulf %280, %281 : vector<8x128xf32>
    %283 = math.tanh %282 : vector<8x128xf32>
    %284 = vector.broadcast %8 : vector<1x128xf32> to vector<8x128xf32>
    %285 = arith.mulf %284, %283 : vector<8x128xf32>
    %286 = vector.broadcast %11 : vector<1x128xf32> to vector<8x128xf32>
    %287 = arith.addf %285, %286 : vector<8x128xf32>
    %288 = vector.extract_strided_slice %287 {offsets = [0, 0], sizes = [8, 16], strides = [1, 1]} : vector<8x128xf32> to vector<8x16xf32>
    %289 = vector.extract_strided_slice %287 {offsets = [0, 16], sizes = [8, 16], strides = [1, 1]} : vector<8x128xf32> to vector<8x16xf32>
    %290 = vector.extract_strided_slice %287 {offsets = [0, 32], sizes = [8, 16], strides = [1, 1]} : vector<8x128xf32> to vector<8x16xf32>
    %291 = vector.extract_strided_slice %287 {offsets = [0, 48], sizes = [8, 16], strides = [1, 1]} : vector<8x128xf32> to vector<8x16xf32>
    %292 = arith.mulf %289, %272 : vector<8x16xf32>
    %293 = arith.mulf %288, %290 : vector<8x16xf32>
    %294 = arith.addf %292, %293 : vector<8x16xf32>
    %295 = math.tanh %294 : vector<8x16xf32>
    %296 = arith.mulf %291, %295 : vector<8x16xf32>
    %297 = tpu.concatenate %296, %12 in 1 : vector<8x16xf32>, vector<8x112xf32> -> vector<8x128xf32>
    %cst_41 = arith.constant dense<0.000000e+00> : vector<8x128xf32>
    %298 = tpu.matmul %144, %184, %cst_41 {dimension_numbers = #tpu.dot_dimension_numbers<[1], [0], [0], [1], [0, 0, 1, 1], [], []>} : vector<8x128xf32>, vector<128x128xf32>, vector<8x128xf32> -> vector<8x128xf32>
    %299 = vector.broadcast %185 : vector<1x128xf32> to vector<8x128xf32>
    %300 = arith.addf %298, %299 : vector<8x128xf32>
    %cst_42 = arith.constant dense<0.000000e+00> : vector<8x128xf32>
    %301 = tpu.matmul %297, %183, %cst_42 {dimension_numbers = #tpu.dot_dimension_numbers<[1], [0], [0], [1], [0, 0, 1, 1], [], []>} : vector<8x128xf32>, vector<128x128xf32>, vector<8x128xf32> -> vector<8x128xf32>
    %302 = arith.addf %300, %301 : vector<8x128xf32>
    %303 = vector.broadcast %8 : vector<1x128xf32> to vector<8x128xf32>
    %304 = arith.mulf %302, %303 : vector<8x128xf32>
    %305 = math.tanh %304 : vector<8x128xf32>
    %306 = vector.broadcast %8 : vector<1x128xf32> to vector<8x128xf32>
    %307 = arith.mulf %306, %305 : vector<8x128xf32>
    %308 = vector.broadcast %11 : vector<1x128xf32> to vector<8x128xf32>
    %309 = arith.addf %307, %308 : vector<8x128xf32>
    %310 = vector.extract_strided_slice %309 {offsets = [0, 0], sizes = [8, 16], strides = [1, 1]} : vector<8x128xf32> to vector<8x16xf32>
    %311 = vector.extract_strided_slice %309 {offsets = [0, 16], sizes = [8, 16], strides = [1, 1]} : vector<8x128xf32> to vector<8x16xf32>
    %312 = vector.extract_strided_slice %309 {offsets = [0, 32], sizes = [8, 16], strides = [1, 1]} : vector<8x128xf32> to vector<8x16xf32>
    %313 = vector.extract_strided_slice %309 {offsets = [0, 48], sizes = [8, 16], strides = [1, 1]} : vector<8x128xf32> to vector<8x16xf32>
    %314 = arith.mulf %311, %294 : vector<8x16xf32>
    %315 = arith.mulf %310, %312 : vector<8x16xf32>
    %316 = arith.addf %314, %315 : vector<8x16xf32>
    %317 = math.tanh %316 : vector<8x16xf32>
    %318 = arith.mulf %313, %317 : vector<8x16xf32>
    %319 = tpu.concatenate %318, %12 in 1 : vector<8x16xf32>, vector<8x112xf32> -> vector<8x128xf32>
    %cst_43 = arith.constant dense<0.000000e+00> : vector<8x128xf32>
    %320 = tpu.matmul %163, %184, %cst_43 {dimension_numbers = #tpu.dot_dimension_numbers<[1], [0], [0], [1], [0, 0, 1, 1], [], []>} : vector<8x128xf32>, vector<128x128xf32>, vector<8x128xf32> -> vector<8x128xf32>
    %321 = vector.broadcast %185 : vector<1x128xf32> to vector<8x128xf32>
    %322 = arith.addf %320, %321 : vector<8x128xf32>
    %cst_44 = arith.constant dense<0.000000e+00> : vector<8x128xf32>
    %323 = tpu.matmul %319, %183, %cst_44 {dimension_numbers = #tpu.dot_dimension_numbers<[1], [0], [0], [1], [0, 0, 1, 1], [], []>} : vector<8x128xf32>, vector<128x128xf32>, vector<8x128xf32> -> vector<8x128xf32>
    %324 = arith.addf %322, %323 : vector<8x128xf32>
    %325 = vector.broadcast %8 : vector<1x128xf32> to vector<8x128xf32>
    %326 = arith.mulf %324, %325 : vector<8x128xf32>
    %327 = math.tanh %326 : vector<8x128xf32>
    %328 = vector.broadcast %8 : vector<1x128xf32> to vector<8x128xf32>
    %329 = arith.mulf %328, %327 : vector<8x128xf32>
    %330 = vector.broadcast %11 : vector<1x128xf32> to vector<8x128xf32>
    %331 = arith.addf %329, %330 : vector<8x128xf32>
    %332 = vector.extract_strided_slice %331 {offsets = [0, 0], sizes = [8, 16], strides = [1, 1]} : vector<8x128xf32> to vector<8x16xf32>
    %333 = vector.extract_strided_slice %331 {offsets = [0, 16], sizes = [8, 16], strides = [1, 1]} : vector<8x128xf32> to vector<8x16xf32>
    %334 = vector.extract_strided_slice %331 {offsets = [0, 32], sizes = [8, 16], strides = [1, 1]} : vector<8x128xf32> to vector<8x16xf32>
    %335 = vector.extract_strided_slice %331 {offsets = [0, 48], sizes = [8, 16], strides = [1, 1]} : vector<8x128xf32> to vector<8x16xf32>
    %336 = arith.mulf %333, %316 : vector<8x16xf32>
    %337 = arith.mulf %332, %334 : vector<8x16xf32>
    %338 = arith.addf %336, %337 : vector<8x16xf32>
    %339 = math.tanh %338 : vector<8x16xf32>
    %340 = arith.mulf %335, %339 : vector<8x16xf32>
    %341 = tpu.concatenate %340, %12 in 1 : vector<8x16xf32>, vector<8x112xf32> -> vector<8x128xf32>
    %cst_45 = arith.constant dense<0.000000e+00> : vector<8x128xf32>
    %342 = tpu.matmul %182, %184, %cst_45 {dimension_numbers = #tpu.dot_dimension_numbers<[1], [0], [0], [1], [0, 0, 1, 1], [], []>} : vector<8x128xf32>, vector<128x128xf32>, vector<8x128xf32> -> vector<8x128xf32>
    %343 = vector.broadcast %185 : vector<1x128xf32> to vector<8x128xf32>
    %344 = arith.addf %342, %343 : vector<8x128xf32>
    %cst_46 = arith.constant dense<0.000000e+00> : vector<8x128xf32>
    %345 = tpu.matmul %341, %183, %cst_46 {dimension_numbers = #tpu.dot_dimension_numbers<[1], [0], [0], [1], [0, 0, 1, 1], [], []>} : vector<8x128xf32>, vector<128x128xf32>, vector<8x128xf32> -> vector<8x128xf32>
    %346 = arith.addf %344, %345 : vector<8x128xf32>
    %347 = vector.broadcast %8 : vector<1x128xf32> to vector<8x128xf32>
    %348 = arith.mulf %346, %347 : vector<8x128xf32>
    %349 = math.tanh %348 : vector<8x128xf32>
    %350 = vector.broadcast %8 : vector<1x128xf32> to vector<8x128xf32>
    %351 = arith.mulf %350, %349 : vector<8x128xf32>
    %352 = vector.broadcast %11 : vector<1x128xf32> to vector<8x128xf32>
    %353 = arith.addf %351, %352 : vector<8x128xf32>
    %354 = vector.extract_strided_slice %353 {offsets = [0, 0], sizes = [8, 16], strides = [1, 1]} : vector<8x128xf32> to vector<8x16xf32>
    %355 = vector.extract_strided_slice %353 {offsets = [0, 16], sizes = [8, 16], strides = [1, 1]} : vector<8x128xf32> to vector<8x16xf32>
    %356 = vector.extract_strided_slice %353 {offsets = [0, 32], sizes = [8, 16], strides = [1, 1]} : vector<8x128xf32> to vector<8x16xf32>
    %357 = vector.extract_strided_slice %353 {offsets = [0, 48], sizes = [8, 16], strides = [1, 1]} : vector<8x128xf32> to vector<8x16xf32>
    %358 = arith.mulf %355, %338 : vector<8x16xf32>
    %359 = arith.mulf %354, %356 : vector<8x16xf32>
    %360 = arith.addf %358, %359 : vector<8x16xf32>
    %361 = math.tanh %360 : vector<8x16xf32>
    %362 = arith.mulf %357, %361 : vector<8x16xf32>
    %363 = tpu.concatenate %362, %12 in 1 : vector<8x16xf32>, vector<8x112xf32> -> vector<8x128xf32>
    %c0_47 = arith.constant 0 : index
    %c0_48 = arith.constant 0 : index
    %364 = vector.load %arg7[%c0_47, %c0_48] : memref<128x128xf32, #tpu.memory_space<vmem>>, vector<128x128xf32>
    %cst_49 = arith.constant dense<0.000000e+00> : vector<8x128xf32>
    %365 = tpu.matmul %363, %364, %cst_49 {dimension_numbers = #tpu.dot_dimension_numbers<[1], [0], [0], [1], [0, 0, 1, 1], [], []>} : vector<8x128xf32>, vector<128x128xf32>, vector<8x128xf32> -> vector<8x128xf32>
    %c0_50 = arith.constant 0 : index
    %c0_51 = arith.constant 0 : index
    %366 = vector.load %arg8[%c0_50, %c0_51] : memref<1x128xf32, #tpu.memory_space<vmem>>, vector<1x128xf32>
    %367 = vector.broadcast %366 : vector<1x128xf32> to vector<8x128xf32>
    %368 = arith.addf %365, %367 : vector<8x128xf32>
    %369 = math.tanh %368 : vector<8x128xf32>
    %c0_52 = arith.constant 0 : index
    %c0_53 = arith.constant 0 : index
    %370 = vector.load %arg9[%c0_52, %c0_53] : memref<8x128xf32, #tpu.memory_space<vmem>>, vector<8x128xf32>
    tpu.vector_store %arg9[%c0_52, %c0_53], %369 {strides = array<i32>} : memref<8x128xf32, #tpu.memory_space<vmem>>, vector<8x128xf32>,
    return
  }
}

</mosaic_0001>

<llo_original>
// kernel: pinn_forward.1
$region0: #{pinn_forward.1}
  #allocation0 [shape = 'u32[]', space=smem, size = 0x4, offset = 0x4, fixed_abs, tag = 'smem constant byte address 0x4 - core index']
  #allocation1 [shape = 'u32[144,128]{1,0:T(1,128)}', space=vmem, size = 0x12000, scoped, tag = 'internal scratch']
  %s0 = inlined_call_operand.vmem [shape: f32[8,8,32], index: 0, kind: input, shape index: {}]
  %s1 = inlined_call_operand.vmem [shape: f32[32,128], index: 1, kind: input, shape index: {}]
  %s2 = inlined_call_operand.vmem [shape: f32[128,128], index: 2, kind: input, shape index: {}]
  %s3 = inlined_call_operand.vmem [shape: f32[1,128], index: 3, kind: input, shape index: {}]
  %s4 = inlined_call_operand.hbm [shape: f32[128,128], index: 4, kind: input, shape index: {}]
  %s5 = inlined_call_operand.hbm [shape: f32[128,128], index: 5, kind: input, shape index: {}]
  %s6 = inlined_call_operand.vmem [shape: f32[1,128], index: 6, kind: input, shape index: {}]
  %s7 = inlined_call_operand.hbm [shape: f32[128,128], index: 7, kind: input, shape index: {}]
  %s8 = inlined_call_operand.vmem [shape: f32[1,128], index: 8, kind: input, shape index: {}]
  %s9 = inlined_call_operand.vmem [shape: f32[8,128], index: 9, kind: output, shape index: {}]
  %s10 = sld [smem:[#allocation0]]
  $region58: #{pinn_forward.1} parent=0
    _
  %s12 = ssub.s32 1, %s10
  %s13 = scalar_select 0, %s12, %s10
  $region1: #{pinn_forward.1} parent=0
    #allocation2 [shape = 'u8[65536]{0}', space=vmem, size = 0x10000, scoped, tag = 'input window, operand 4, single buffered']
    #allocation3 [shape = 's32[1]{0}', space=sflag, size = 0x4, scoped, tag = 'scoped memory for pinn_forward.1']
    #allocation4 [shape = 'u8[65536]{0}', space=vmem, size = 0x10000, scoped, tag = 'input window, operand 5, single buffered']
    #allocation5 [shape = 's32[1]{0}', space=sflag, size = 0x4, scoped, tag = 'scoped memory for pinn_forward.1']
    #allocation6 [shape = 'u8[65536]{0}', space=vmem, size = 0x10000, scoped, tag = 'input window, operand 7, single buffered']
    %14 = vsyncpa [#allocation3], 0
    %15 = vsyncpa [#allocation5], 0
    // Predicated region
    $region2: #{pinn_forward.1} parent=1 // pred_check
      _
    $region3: #{pinn_forward.1} parent=1 // pred_check_branch
      %17 = sbr.rel (0) target = $region5
    $region4: #{pinn_forward.1} parent=1 // pred_region
      _
    $region5: #{pinn_forward.1} parent=1 // pred_fallthru
      _
    // Predicated region
    $region6: #{pinn_forward.1} parent=1 // pred_check
      _
    $region7: #{pinn_forward.1} parent=1 // pred_check_branch
      %19 = sbr.rel (0) target = $region9
    $region8: #{pinn_forward.1} parent=1 // pred_region
      _
    $region9: #{pinn_forward.1} parent=1 // pred_fallthru
      _
    // Predicated region
    $region10: #{pinn_forward.1} parent=1 // pred_check
      _
    $region11: #{pinn_forward.1} parent=1 // pred_check_branch
      %21 = sbr.rel (0) target = $region13
    $region12: #{pinn_forward.1} parent=1 // pred_region
      _
    $region13: #{pinn_forward.1} parent=1 // pred_fallthru
      _
    // Predicated region
    $region14: #{pinn_forward.1} parent=1 // pred_check
      _
    $region15: #{pinn_forward.1} parent=1 // pred_check_branch
      %23 = sbr.rel (0) target = $region17
    $region16: #{pinn_forward.1} parent=1 // pred_region
      _
    $region17: #{pinn_forward.1} parent=1 // pred_fallthru
      _
    // Predicated region
    $region18: #{pinn_forward.1} parent=1 // pred_check
      _
    $region19: #{pinn_forward.1} parent=1 // pred_check_branch
      %25 = sbr.rel (0) target = $region21
    $region20: #{pinn_forward.1} parent=1 // pred_region
      %s27 = ssub.s32 2048, 2048
      %28 = vsyncadd [#allocation3], %s27
      %s29 = sshll.u32 [#allocation2], 4
      %s30 = int_to_ptr.vmem [resolvable:$true] %s29
      %35 = dma.hbm_to_vmem [thread:$0]  %s4, 2048, %s30, [#allocation3], 128, 128, 8
    $region21: #{pinn_forward.1} parent=1 // pred_fallthru
      _
    // Predicated region
    $region22: #{pinn_forward.1} parent=1 // pred_check
      _
    $region23: #{pinn_forward.1} parent=1 // pred_check_branch
      %37 = sbr.rel (0) target = $region25
    $region24: #{pinn_forward.1} parent=1 // pred_region
      %s39 = ssub.s32 2048, 2048
      %40 = vsyncadd [#allocation5], %s39
      %s41 = sshll.u32 [#allocation4], 4
      %s42 = int_to_ptr.vmem [resolvable:$true] %s41
      %47 = dma.hbm_to_vmem [thread:$0]  %s5, 2048, %s42, [#allocation5], 128, 128, 8
    $region25: #{pinn_forward.1} parent=1 // pred_fallthru
      _
    // Predicated region
    $region26: #{pinn_forward.1} parent=1 // pred_check
      _
    $region27: #{pinn_forward.1} parent=1 // pred_check_branch
      %49 = sbr.rel (0) target = $region29
    $region28: #{pinn_forward.1} parent=1 // pred_region
      _
    $region29: #{pinn_forward.1} parent=1 // pred_fallthru
      _
    // Predicated region
    $region30: #{pinn_forward.1} parent=1 // pred_check
      _
    $region31: #{pinn_forward.1} parent=1 // pred_check_branch
      %51 = sbr.rel (0) target = $region33
    $region32: #{pinn_forward.1} parent=1 // pred_region
      %s53 = ssub.s32 2048, 2048
      %54 = vsyncadd [#allocation5], %s53
      %s55 = sshll.u32 [#allocation6], 4
      %s56 = int_to_ptr.vmem [resolvable:$true] %s55
      %61 = dma.hbm_to_vmem [thread:$0]  %s7, 2048, %s56, [#allocation5], 128, 128, 8
    $region33: #{pinn_forward.1} parent=1 // pred_fallthru
      _
    // Predicated region
    $region34: #{pinn_forward.1} parent=1 // pred_check
      _
    $region35: #{pinn_forward.1} parent=1 // pred_check_branch
      %63 = sbr.rel (0) target = $region37
    $region36: #{pinn_forward.1} parent=1 // pred_region
      _
    $region37: #{pinn_forward.1} parent=1 // pred_fallthru
      _
    // Predicated region
    $region38: #{pinn_forward.1} parent=1 // pred_check
      _
    $region39: #{pinn_forward.1} parent=1 // pred_check_branch
      %65 = sbr.rel (0) target = $region41
    $region40: #{pinn_forward.1} parent=1 // pred_region
      %66 = dma.done [#allocation3], 2048
    $region41: #{pinn_forward.1} parent=1 // pred_fallthru
      _
    // Predicated region
    $region42: #{pinn_forward.1} parent=1 // pred_check
      _
    $region43: #{pinn_forward.1} parent=1 // pred_check_branch
      %68 = sbr.rel (0) target = $region45
    $region44: #{pinn_forward.1} parent=1 // pred_region
      %69 = dma.done [#allocation5], 2048
    $region45: #{pinn_forward.1} parent=1 // pred_fallthru
      _
    // Predicated region
    $region46: #{pinn_forward.1} parent=1 // pred_check
      _
    $region47: #{pinn_forward.1} parent=1 // pred_check_branch
      %71 = sbr.rel (0) target = $region49
    $region48: #{pinn_forward.1} parent=1 // pred_region
      %72 = dma.done [#allocation5], 2048
    $region49: #{pinn_forward.1} parent=1 // pred_fallthru
      _
    %v73 = vlaneseq
    %v74 = vand.u32 %v73, 127
    %vm75 = vcmp.ge.s32.totalorder %v74, 32
    %vm76 = vcmp.lt.s32.totalorder %v74, 48
    %vm77 = vmand %vm75, %vm76
    %v78 = vsel %vm77, 1.0, 0.5
    %v79 = vsel %vm77, 0.0, 0.5
    %v80 = vld [vmem:[%s0] sm:$0xff]
    %v81 = vld [vmem:[%s0 + $0x8] sm:$0xff]
    %v82 = vld [vmem:[%s0 + $0x10] sm:$0xff]
    %v83 = vld [vmem:[%s0 + $0x18] sm:$0xff]
    %v84 = vld [vmem:[%s0 + $0x20] sm:$0xff]
    %v85 = vld [vmem:[%s0 + $0x28] sm:$0xff]
    %v86 = vld [vmem:[%s0 + $0x30] sm:$0xff]
    %v87 = vld [vmem:[%s0 + $0x38] sm:$0xff]
    %v88 = vld [vmem:[%s1] sm:$0xff]
    %v89 = vld [vmem:[%s1 + $0x8] sm:$0xff]
    %v90 = vld [vmem:[%s1 + $0x10] sm:$0xff]
    %v91 = vld [vmem:[%s1 + $0x18] sm:$0xff]
    %v92 = vld [vmem:[%s3] sm:$0x1]
    %v94 = vlaneseq
    %v95 = vshrl.u32 %v94, 7
    %v96 = vsub.s32 0, %v95
    %v97 = vrot.slane %v92, %v96
    %vm99 = vcmask 261120
    %v101 = vsel %vm99, %v80, 0
    %v104 = vsel %vm99, %v81, 0
    %v107 = vsel %vm99, %v82, 0
    %v110 = vsel %vm99, %v83, 0
    %v113 = vsel %vm99, %v84, 0
    %v116 = vsel %vm99, %v85, 0
    %v119 = vsel %vm99, %v86, 0
    %v122 = vsel %vm99, %v87, 0
    %124 = vmatprep.subr.mxu0 0.0
    %125 = vmatpush1.msra.mxu0 %v88
    %126 = vmatprep.subr.mxu0 0.0
    %127 = vmatpush1.msra.mxu0 %v89
    %128 = vmatprep.subr.mxu0 0.0
    %129 = vmatpush1.msra.mxu0 %v90
    %130 = vmatprep.subr.mxu0 0.0
    %131 = vmatpush1.msra.mxu0 %v91
    %132 = vmatprep.subr.mxu0 0.0
    %133 = vmatpush1.msra.mxu0 0.0
    %134 = vmatprep.subr.mxu0 0.0
    %135 = vmatpush1.msra.mxu0 0.0
    %136 = vmatprep.subr.mxu0 0.0
    %137 = vmatpush1.msra.mxu0 0.0
    %138 = vmatprep.subr.mxu0 0.0
    %139 = vmatpush1.msra.mxu0 0.0
    %140 = vmatprep.subr.mxu0 0.0
    %141 = vmatpush1.msra.mxu0 0.0
    %142 = vmatprep.subr.mxu0 0.0
    %143 = vmatpush1.msra.mxu0 0.0
    %144 = vmatprep.subr.mxu0 0.0
    %145 = vmatpush1.msra.mxu0 0.0
    %146 = vmatprep.subr.mxu0 0.0
    %147 = vmatpush1.msra.mxu0 0.0
    %148 = vmatprep.subr.mxu0 0.0
    %149 = vmatpush1.msra.mxu0 0.0
    %150 = vmatprep.subr.mxu0 0.0
    %151 = vmatpush1.msra.mxu0 0.0
    %152 = vmatprep.subr.mxu0 0.0
    %153 = vmatpush1.msra.mxu0 0.0
    %154 = vmatprep.subr.mxu0 0.0
    %155 = vmatpush1.msra.mxu0 0.0
    %156 = vmatprep.subr.mxu0 0.0
    %157 = vmatpush1.msra.mxu0 0.0
    %158 = vmatprep.subr.mxu0 0.0
    %159 = vmatpush1.msra.mxu0 0.0
    %160 = vmatprep.subr.mxu0 0.0
    %161 = vmatpush1.msra.mxu0 0.0
    %162 = vmatprep.subr.mxu0 0.0
    %163 = vmatpush1.msra.mxu0 0.0
    %164 = vmatprep.subr.mxu0 0.0
    %165 = vmatpush1.msra.mxu0 0.0
    %166 = vmatprep.subr.mxu0 0.0
    %167 = vmatpush1.msra.mxu0 0.0
    %168 = vmatprep.subr.mxu0 0.0
    %169 = vmatpush1.msra.mxu0 0.0
    %170 = vmatprep.subr.mxu0 0.0
    %171 = vmatpush1.msra.mxu0 0.0
    %172 = vmatprep.subr.mxu0 0.0
    %173 = vmatpush1.msra.mxu0 0.0
    %174 = vmatprep.subr.mxu0 0.0
    %175 = vmatpush1.msra.mxu0 0.0
    %176 = vmatprep.subr.mxu0 0.0
    %177 = vmatpush1.msra.mxu0 0.0
    %178 = vmatprep.subr.mxu0 0.0
    %179 = vmatpush1.msra.mxu0 0.0
    %180 = vmatprep.subr.mxu0 0.0
    %181 = vmatpush1.msra.mxu0 0.0
    %182 = vmatprep.subr.mxu0 0.0
    %183 = vmatpush1.msra.mxu0 0.0
    %184 = vmatprep.subr.mxu0 0.0
    %185 = vmatpush1.msra.mxu0 0.0
    %186 = vmatprep.subr.mxu0 0.0
    %187 = vmatpush1.msra.mxu0 0.0
    %188 = vmatprep.mubr.f32.mxu0 0.0
    %189 = vmatmul.mubr.f32.gmra.mrb[0].mxu0 %v101
    %v190 = vpop.f32.mrb[0].mxu0
    %v191 = vadd.f32 %v97, %v190
    %v192 = vpop.f32.mrb[0].mxu0
    %193 = vmatprep.mubr.f32.mxu0 0.0
    %194 = vmatmul.mubr.f32.gmra.mrb[0].mxu0 %v104
    %v195 = vpop.f32.mrb[0].mxu0
    %v196 = vadd.f32 %v97, %v195
    %v197 = vpop.f32.mrb[0].mxu0
    %198 = vmatprep.mubr.f32.mxu0 0.0
    %199 = vmatmul.mubr.f32.gmra.mrb[0].mxu0 %v107
    %v200 = vpop.f32.mrb[0].mxu0
    %v201 = vadd.f32 %v97, %v200
    %v202 = vpop.f32.mrb[0].mxu0
    %203 = vmatprep.mubr.f32.mxu0 0.0
    %204 = vmatmul.mubr.f32.gmra.mrb[0].mxu0 %v110
    %v205 = vpop.f32.mrb[0].mxu0
    %v206 = vadd.f32 %v97, %v205
    %v207 = vpop.f32.mrb[0].mxu0
    %208 = vmatprep.mubr.f32.mxu0 0.0
    %209 = vmatmul.mubr.f32.gmra.mrb[0].mxu0 %v113
    %v210 = vpop.f32.mrb[0].mxu0
    %v211 = vadd.f32 %v97, %v210
    %v212 = vpop.f32.mrb[0].mxu0
    %213 = vmatprep.mubr.f32.mxu0 0.0
    %214 = vmatmul.mubr.f32.gmra.mrb[0].mxu0 %v116
    %v215 = vpop.f32.mrb[0].mxu0
    %v216 = vadd.f32 %v97, %v215
    %v217 = vpop.f32.mrb[0].mxu0
    %218 = vmatprep.mubr.f32.mxu0 0.0
    %219 = vmatmul.mubr.f32.gmra.mrb[0].mxu0 %v119
    %v220 = vpop.f32.mrb[0].mxu0
    %v221 = vadd.f32 %v97, %v220
    %v222 = vpop.f32.mrb[0].mxu0
    %223 = vmatprep.mubr.f32.mxu0 0.0
    %224 = vmatmul.mubr.f32.gmra.mrb[0].mxu0 %v122
    %v225 = vpop.f32.mrb[0].mxu0
    %v226 = vadd.f32 %v97, %v225
    %v227 = vpop.f32.mrb[0].mxu0
    %228 = vdwg.mxu0
    %v229 = vld [vmem:[%s2] sm:$0xff]
    %v230 = vld [vmem:[%s2 + $0x8] sm:$0xff]
    %v231 = vld [vmem:[%s2 + $0x10] sm:$0xff]
    %v232 = vld [vmem:[%s2 + $0x18] sm:$0xff]
    %v233 = vld [vmem:[%s2 + $0x20] sm:$0xff]
    %v234 = vld [vmem:[%s2 + $0x28] sm:$0xff]
    %v235 = vld [vmem:[%s2 + $0x30] sm:$0xff]
    %v236 = vld [vmem:[%s2 + $0x38] sm:$0xff]
    %v237 = vld [vmem:[%s2 + $0x40] sm:$0xff]
    %v238 = vld [vmem:[%s2 + $0x48] sm:$0xff]
    %v239 = vld [vmem:[%s2 + $0x50] sm:$0xff]
    %v240 = vld [vmem:[%s2 + $0x58] sm:$0xff]
    %v241 = vld [vmem:[%s2 + $0x60] sm:$0xff]
    %v242 = vld [vmem:[%s2 + $0x68] sm:$0xff]
    %v243 = vld [vmem:[%s2 + $0x70] sm:$0xff]
    %v244 = vld [vmem:[%s2 + $0x78] sm:$0xff]
    %245 = vmatprep.subr.mxu0 0.0
    %246 = vmatpush1.msra.mxu0 %v229
    %247 = vmatprep.subr.mxu0 0.0
    %248 = vmatpush1.msra.mxu0 %v230
    %249 = vmatprep.subr.mxu0 0.0
    %250 = vmatpush1.msra.mxu0 %v231
    %251 = vmatprep.subr.mxu0 0.0
    %252 = vmatpush1.msra.mxu0 %v232
    %253 = vmatprep.subr.mxu0 0.0
    %254 = vmatpush1.msra.mxu0 %v233
    %255 = vmatprep.subr.mxu0 0.0
    %256 = vmatpush1.msra.mxu0 %v234
    %257 = vmatprep.subr.mxu0 0.0
    %258 = vmatpush1.msra.mxu0 %v235
    %259 = vmatprep.subr.mxu0 0.0
    %260 = vmatpush1.msra.mxu0 %v236
    %261 = vmatprep.subr.mxu0 0.0
    %262 = vmatpush1.msra.mxu0 %v237
    %263 = vmatprep.subr.mxu0 0.0
    %264 = vmatpush1.msra.mxu0 %v238
    %265 = vmatprep.subr.mxu0 0.0
    %266 = vmatpush1.msra.mxu0 %v239
    %267 = vmatprep.subr.mxu0 0.0
    %268 = vmatpush1.msra.mxu0 %v240
    %269 = vmatprep.subr.mxu0 0.0
    %270 = vmatpush1.msra.mxu0 %v241
    %271 = vmatprep.subr.mxu0 0.0
    %272 = vmatpush1.msra.mxu0 %v242
    %273 = vmatprep.subr.mxu0 0.0
    %274 = vmatpush1.msra.mxu0 %v243
    %275 = vmatprep.subr.mxu0 0.0
    %276 = vmatpush1.msra.mxu0 %v244
    %277 = vmatprep.subr.mxu0 0.0
    %278 = vmatpush1.msra.mxu0 0.0
    %279 = vmatprep.subr.mxu0 0.0
    %280 = vmatpush1.msra.mxu0 0.0
    %281 = vmatprep.subr.mxu0 0.0
    %282 = vmatpush1.msra.mxu0 0.0
    %283 = vmatprep.subr.mxu0 0.0
    %284 = vmatpush1.msra.mxu0 0.0
    %285 = vmatprep.subr.mxu0 0.0
    %286 = vmatpush1.msra.mxu0 0.0
    %287 = vmatprep.subr.mxu0 0.0
    %288 = vmatpush1.msra.mxu0 0.0
    %289 = vmatprep.subr.mxu0 0.0
    %290 = vmatpush1.msra.mxu0 0.0
    %291 = vmatprep.subr.mxu0 0.0
    %292 = vmatpush1.msra.mxu0 0.0
    %293 = vmatprep.subr.mxu0 0.0
    %294 = vmatpush1.msra.mxu0 0.0
    %295 = vmatprep.subr.mxu0 0.0
    %296 = vmatpush1.msra.mxu0 0.0
    %297 = vmatprep.subr.mxu0 0.0
    %298 = vmatpush1.msra.mxu0 0.0
    %299 = vmatprep.subr.mxu0 0.0
    %300 = vmatpush1.msra.mxu0 0.0
    %301 = vmatprep.subr.mxu0 0.0
    %302 = vmatpush1.msra.mxu0 0.0
    %303 = vmatprep.subr.mxu0 0.0
    %304 = vmatpush1.msra.mxu0 0.0
    %305 = vmatprep.subr.mxu0 0.0
    %306 = vmatpush1.msra.mxu0 0.0
    %307 = vmatprep.subr.mxu0 0.0
    %308 = vmatpush1.msra.mxu0 0.0
    %309 = vmatprep.mubr.f32.mxu0 0.0
    %310 = vmatmul.mubr.f32.gmra.mrb[0].mxu0 0.0
    %v311 = vpop.f32.mrb[0].mxu0
    %v312 = vadd.f32 0.0, %v311
    %v313 = vpop.f32.mrb[0].mxu0
    %314 = vdwg.mxu0
    %v315 = vadd.f32 %v191, %v312
    %v316 = vmul.f32 %v315, %v78
    %v317 = vtanh.pop %v316
    %v318 = vmul.f32 %v78, %v317
    %v319 = vadd.f32 %v318, %v79
    %v320 = vmul.f32 %v319, 0.0
    %322 = vrot.lane.b32.xlu0 %v319, 96
    %v323 = vpop.permute.xlu0 %322
    %v325 = vmul.f32 %v319, %v323
    %327 = vrot.lane.b32.xlu0 %v325, 16
    %v328 = vpop.permute.xlu0 %327
    %v330 = vadd.f32 %v320, %v328
    %v331 = vtanh.pop %v330
    %333 = vrot.lane.b32.xlu0 %v331, 32
    %v334 = vpop.permute.xlu0 %333
    %v336 = vmul.f32 %v319, %v334
    %338 = vrot.lane.b32.xlu0 %v336, 80
    %v339 = vpop.permute.xlu0 %338
    %vm341 = vcmask 130048
    %v342 = vsel %vm341, %v339, 0.0
    %343 = vmatprep.subr.mxu0 0.0
    %344 = vmatpush1.msra.mxu0 %v229
    %345 = vmatprep.subr.mxu0 0.0
    %346 = vmatpush1.msra.mxu0 %v230
    %347 = vmatprep.subr.mxu0 0.0
    %348 = vmatpush1.msra.mxu0 %v231
    %349 = vmatprep.subr.mxu0 0.0
    %350 = vmatpush1.msra.mxu0 %v232
    %351 = vmatprep.subr.mxu0 0.0
    %352 = vmatpush1.msra.mxu0 %v233
    %353 = vmatprep.subr.mxu0 0.0
    %354 = vmatpush1.msra.mxu0 %v234
    %355 = vmatprep.subr.mxu0 0.0
    %356 = vmatpush1.msra.mxu0 %v235
    %357 = vmatprep.subr.mxu0 0.0
    %358 = vmatpush1.msra.mxu0 %v236
    %359 = vmatprep.subr.mxu0 0.0
    %360 = vmatpush1.msra.mxu0 %v237
    %361 = vmatprep.subr.mxu0 0.0
    %362 = vmatpush1.msra.mxu0 %v238
    %363 = vmatprep.subr.mxu0 0.0
    %364 = vmatpush1.msra.mxu0 %v239
    %365 = vmatprep.subr.mxu0 0.0
    %366 = vmatpush1.msra.mxu0 %v240
    %367 = vmatprep.subr.mxu0 0.0
    %368 = vmatpush1.msra.mxu0 %v241
    %369 = vmatprep.subr.mxu0 0.0
    %370 = vmatpush1.msra.mxu0 %v242
    %371 = vmatprep.subr.mxu0 0.0
    %372 = vmatpush1.msra.mxu0 %v243
    %373 = vmatprep.subr.mxu0 0.0
    %374 = vmatpush1.msra.mxu0 %v244
    %375 = vmatprep.subr.mxu0 0.0
    %376 = vmatpush1.msra.mxu0 0.0
    %377 = vmatprep.subr.mxu0 0.0
    %378 = vmatpush1.msra.mxu0 0.0
    %379 = vmatprep.subr.mxu0 0.0
    %380 = vmatpush1.msra.mxu0 0.0
    %381 = vmatprep.subr.mxu0 0.0
    %382 = vmatpush1.msra.mxu0 0.0
    %383 = vmatprep.subr.mxu0 0.0
    %384 = vmatpush1.msra.mxu0 0.0
    %385 = vmatprep.subr.mxu0 0.0
    %386 = vmatpush1.msra.mxu0 0.0
    %387 = vmatprep.subr.mxu0 0.0
    %388 = vmatpush1.msra.mxu0 0.0
    %389 = vmatprep.subr.mxu0 0.0
    %390 = vmatpush1.msra.mxu0 0.0
    %391 = vmatprep.subr.mxu0 0.0
    %392 = vmatpush1.msra.mxu0 0.0
    %393 = vmatprep.subr.mxu0 0.0
    %394 = vmatpush1.msra.mxu0 0.0
    %395 = vmatprep.subr.mxu0 0.0
    %396 = vmatpush1.msra.mxu0 0.0
    %397 = vmatprep.subr.mxu0 0.0
    %398 = vmatpush1.msra.mxu0 0.0
    %399 = vmatprep.subr.mxu0 0.0
    %400 = vmatpush1.msra.mxu0 0.0
    %401 = vmatprep.subr.mxu0 0.0
    %402 = vmatpush1.msra.mxu0 0.0
    %403 = vmatprep.subr.mxu0 0.0
    %404 = vmatpush1.msra.mxu0 0.0
    %405 = vmatprep.subr.mxu0 0.0
    %406 = vmatpush1.msra.mxu0 0.0
    %407 = vmatprep.mubr.f32.mxu0 0.0
    %408 = vmatmul.mubr.f32.gmra.mrb[0].mxu0 %v342
    %v409 = vpop.f32.mrb[0].mxu0
    %v410 = vadd.f32 0.0, %v409
    %v411 = vpop.f32.mrb[0].mxu0
    %412 = vdwg.mxu0
    %v413 = vadd.f32 %v196, %v410
    %v414 = vmul.f32 %v413, %v78
    %v415 = vtanh.pop %v414
    %v416 = vmul.f32 %v78, %v415
    %v417 = vadd.f32 %v416, %v79
    %v418 = vmul.f32 %v417, %v330
    %420 = vrot.lane.b32.xlu0 %v417, 96
    %v421 = vpop.permute.xlu0 %420
    %v423 = vmul.f32 %v417, %v421
    %425 = vrot.lane.b32.xlu0 %v423, 16
    %v426 = vpop.permute.xlu0 %425
    %v428 = vadd.f32 %v418, %v426
    %v429 = vtanh.pop %v428
    %431 = vrot.lane.b32.xlu0 %v429, 32
    %v432 = vpop.permute.xlu0 %431
    %v434 = vmul.f32 %v417, %v432
    %436 = vrot.lane.b32.xlu0 %v434, 80
    %v437 = vpop.permute.xlu0 %436
    %v439 = vsel %vm341, %v437, 0.0
    %440 = vmatprep.subr.mxu0 0.0
    %441 = vmatpush1.msra.mxu0 %v229
    %442 = vmatprep.subr.mxu0 0.0
    %443 = vmatpush1.msra.mxu0 %v230
    %444 = vmatprep.subr.mxu0 0.0
    %445 = vmatpush1.msra.mxu0 %v231
    %446 = vmatprep.subr.mxu0 0.0
    %447 = vmatpush1.msra.mxu0 %v232
    %448 = vmatprep.subr.mxu0 0.0
    %449 = vmatpush1.msra.mxu0 %v233
    %450 = vmatprep.subr.mxu0 0.0
    %451 = vmatpush1.msra.mxu0 %v234
    %452 = vmatprep.subr.mxu0 0.0
    %453 = vmatpush1.msra.mxu0 %v235
    %454 = vmatprep.subr.mxu0 0.0
    %455 = vmatpush1.msra.mxu0 %v236
    %456 = vmatprep.subr.mxu0 0.0
    %457 = vmatpush1.msra.mxu0 %v237
    %458 = vmatprep.subr.mxu0 0.0
    %459 = vmatpush1.msra.mxu0 %v238
    %460 = vmatprep.subr.mxu0 0.0
    %461 = vmatpush1.msra.mxu0 %v239
    %462 = vmatprep.subr.mxu0 0.0
    %463 = vmatpush1.msra.mxu0 %v240
    %464 = vmatprep.subr.mxu0 0.0
    %465 = vmatpush1.msra.mxu0 %v241
    %466 = vmatprep.subr.mxu0 0.0
    %467 = vmatpush1.msra.mxu0 %v242
    %468 = vmatprep.subr.mxu0 0.0
    %469 = vmatpush1.msra.mxu0 %v243
    %470 = vmatprep.subr.mxu0 0.0
    %471 = vmatpush1.msra.mxu0 %v244
    %472 = vmatprep.subr.mxu0 0.0
    %473 = vmatpush1.msra.mxu0 0.0
    %474 = vmatprep.subr.mxu0 0.0
    %475 = vmatpush1.msra.mxu0 0.0
    %476 = vmatprep.subr.mxu0 0.0
    %477 = vmatpush1.msra.mxu0 0.0
    %478 = vmatprep.subr.mxu0 0.0
    %479 = vmatpush1.msra.mxu0 0.0
    %480 = vmatprep.subr.mxu0 0.0
    %481 = vmatpush1.msra.mxu0 0.0
    %482 = vmatprep.subr.mxu0 0.0
    %483 = vmatpush1.msra.mxu0 0.0
    %484 = vmatprep.subr.mxu0 0.0
    %485 = vmatpush1.msra.mxu0 0.0
    %486 = vmatprep.subr.mxu0 0.0
    %487 = vmatpush1.msra.mxu0 0.0
    %488 = vmatprep.subr.mxu0 0.0
    %489 = vmatpush1.msra.mxu0 0.0
    %490 = vmatprep.subr.mxu0 0.0
    %491 = vmatpush1.msra.mxu0 0.0
    %492 = vmatprep.subr.mxu0 0.0
    %493 = vmatpush1.msra.mxu0 0.0
    %494 = vmatprep.subr.mxu0 0.0
    %495 = vmatpush1.msra.mxu0 0.0
    %496 = vmatprep.subr.mxu0 0.0
    %497 = vmatpush1.msra.mxu0 0.0
    %498 = vmatprep.subr.mxu0 0.0
    %499 = vmatpush1.msra.mxu0 0.0
    %500 = vmatprep.subr.mxu0 0.0
    %501 = vmatpush1.msra.mxu0 0.0
    %502 = vmatprep.subr.mxu0 0.0
    %503 = vmatpush1.msra.mxu0 0.0
    %504 = vmatprep.mubr.f32.mxu0 0.0
    %505 = vmatmul.mubr.f32.gmra.mrb[0].mxu0 %v439
    %v506 = vpop.f32.mrb[0].mxu0
    %v507 = vadd.f32 0.0, %v506
    %v508 = vpop.f32.mrb[0].mxu0
    %509 = vdwg.mxu0
    %v510 = vadd.f32 %v201, %v507
    %v511 = vmul.f32 %v510, %v78
    %v512 = vtanh.pop %v511
    %v513 = vmul.f32 %v78, %v512
    %v514 = vadd.f32 %v513, %v79
    %v515 = vmul.f32 %v514, %v428
    %517 = vrot.lane.b32.xlu0 %v514, 96
    %v518 = vpop.permute.xlu0 %517
    %v520 = vmul.f32 %v514, %v518
    %522 = vrot.lane.b32.xlu0 %v520, 16
    %v523 = vpop.permute.xlu0 %522
    %v525 = vadd.f32 %v515, %v523
    %v526 = vtanh.pop %v525
    %528 = vrot.lane.b32.xlu0 %v526, 32
    %v529 = vpop.permute.xlu0 %528
    %v531 = vmul.f32 %v514, %v529
    %533 = vrot.lane.b32.xlu0 %v531, 80
    %v534 = vpop.permute.xlu0 %533
    %v536 = vsel %vm341, %v534, 0.0
    %537 = vmatprep.subr.mxu0 0.0
    %538 = vmatpush1.msra.mxu0 %v229
    %539 = vmatprep.subr.mxu0 0.0
    %540 = vmatpush1.msra.mxu0 %v230
    %541 = vmatprep.subr.mxu0 0.0
    %542 = vmatpush1.msra.mxu0 %v231
    %543 = vmatprep.subr.mxu0 0.0
    %544 = vmatpush1.msra.mxu0 %v232
    %545 = vmatprep.subr.mxu0 0.0
    %546 = vmatpush1.msra.mxu0 %v233
    %547 = vmatprep.subr.mxu0 0.0
    %548 = vmatpush1.msra.mxu0 %v234
    %549 = vmatprep.subr.mxu0 0.0
    %550 = vmatpush1.msra.mxu0 %v235
    %551 = vmatprep.subr.mxu0 0.0
    %552 = vmatpush1.msra.mxu0 %v236
    %553 = vmatprep.subr.mxu0 0.0
    %554 = vmatpush1.msra.mxu0 %v237
    %555 = vmatprep.subr.mxu0 0.0
    %556 = vmatpush1.msra.mxu0 %v238
    %557 = vmatprep.subr.mxu0 0.0
    %558 = vmatpush1.msra.mxu0 %v239
    %559 = vmatprep.subr.mxu0 0.0
    %560 = vmatpush1.msra.mxu0 %v240
    %561 = vmatprep.subr.mxu0 0.0
    %562 = vmatpush1.msra.mxu0 %v241
    %563 = vmatprep.subr.mxu0 0.0
    %564 = vmatpush1.msra.mxu0 %v242
    %565 = vmatprep.subr.mxu0 0.0
    %566 = vmatpush1.msra.mxu0 %v243
    %567 = vmatprep.subr.mxu0 0.0
    %568 = vmatpush1.msra.mxu0 %v244
    %569 = vmatprep.subr.mxu0 0.0
    %570 = vmatpush1.msra.mxu0 0.0
    %571 = vmatprep.subr.mxu0 0.0
    %572 = vmatpush1.msra.mxu0 0.0
    %573 = vmatprep.subr.mxu0 0.0
    %574 = vmatpush1.msra.mxu0 0.0
    %575 = vmatprep.subr.mxu0 0.0
    %576 = vmatpush1.msra.mxu0 0.0
    %577 = vmatprep.subr.mxu0 0.0
    %578 = vmatpush1.msra.mxu0 0.0
    %579 = vmatprep.subr.mxu0 0.0
    %580 = vmatpush1.msra.mxu0 0.0
    %581 = vmatprep.subr.mxu0 0.0
    %582 = vmatpush1.msra.mxu0 0.0
    %583 = vmatprep.subr.mxu0 0.0
    %584 = vmatpush1.msra.mxu0 0.0
    %585 = vmatprep.subr.mxu0 0.0
    %586 = vmatpush1.msra.mxu0 0.0
    %587 = vmatprep.subr.mxu0 0.0
    %588 = vmatpush1.msra.mxu0 0.0
    %589 = vmatprep.subr.mxu0 0.0
    %590 = vmatpush1.msra.mxu0 0.0
    %591 = vmatprep.subr.mxu0 0.0
    %592 = vmatpush1.msra.mxu0 0.0
    %593 = vmatprep.subr.mxu0 0.0
    %594 = vmatpush1.msra.mxu0 0.0
    %595 = vmatprep.subr.mxu0 0.0
    %596 = vmatpush1.msra.mxu0 0.0
    %597 = vmatprep.subr.mxu0 0.0
    %598 = vmatpush1.msra.mxu0 0.0
    %599 = vmatprep.subr.mxu0 0.0
    %600 = vmatpush1.msra.mxu0 0.0
    %601 = vmatprep.mubr.f32.mxu0 0.0
    %602 = vmatmul.mubr.f32.gmra.mrb[0].mxu0 %v536
    %v603 = vpop.f32.mrb[0].mxu0
    %v604 = vadd.f32 0.0, %v603
    %v605 = vpop.f32.mrb[0].mxu0
    %606 = vdwg.mxu0
    %v607 = vadd.f32 %v206, %v604
    %v608 = vmul.f32 %v607, %v78
    %v609 = vtanh.pop %v608
    %v610 = vmul.f32 %v78, %v609
    %v611 = vadd.f32 %v610, %v79
    %v612 = vmul.f32 %v611, %v525
    %614 = vrot.lane.b32.xlu0 %v611, 96
    %v615 = vpop.permute.xlu0 %614
    %v617 = vmul.f32 %v611, %v615
    %619 = vrot.lane.b32.xlu0 %v617, 16
    %v620 = vpop.permute.xlu0 %619
    %v622 = vadd.f32 %v612, %v620
    %v623 = vtanh.pop %v622
    %625 = vrot.lane.b32.xlu0 %v623, 32
    %v626 = vpop.permute.xlu0 %625
    %v628 = vmul.f32 %v611, %v626
    %630 = vrot.lane.b32.xlu0 %v628, 80
    %v631 = vpop.permute.xlu0 %630
    %v633 = vsel %vm341, %v631, 0.0
    %634 = vmatprep.subr.mxu0 0.0
    %635 = vmatpush1.msra.mxu0 %v229
    %636 = vmatprep.subr.mxu0 0.0
    %637 = vmatpush1.msra.mxu0 %v230
    %638 = vmatprep.subr.mxu0 0.0
    %639 = vmatpush1.msra.mxu0 %v231
    %640 = vmatprep.subr.mxu0 0.0
    %641 = vmatpush1.msra.mxu0 %v232
    %642 = vmatprep.subr.mxu0 0.0
    %643 = vmatpush1.msra.mxu0 %v233
    %644 = vmatprep.subr.mxu0 0.0
    %645 = vmatpush1.msra.mxu0 %v234
    %646 = vmatprep.subr.mxu0 0.0
    %647 = vmatpush1.msra.mxu0 %v235
    %648 = vmatprep.subr.mxu0 0.0
    %649 = vmatpush1.msra.mxu0 %v236
    %650 = vmatprep.subr.mxu0 0.0
    %651 = vmatpush1.msra.mxu0 %v237
    %652 = vmatprep.subr.mxu0 0.0
    %653 = vmatpush1.msra.mxu0 %v238
    %654 = vmatprep.subr.mxu0 0.0
    %655 = vmatpush1.msra.mxu0 %v239
    %656 = vmatprep.subr.mxu0 0.0
    %657 = vmatpush1.msra.mxu0 %v240
    %658 = vmatprep.subr.mxu0 0.0
    %659 = vmatpush1.msra.mxu0 %v241
    %660 = vmatprep.subr.mxu0 0.0
    %661 = vmatpush1.msra.mxu0 %v242
    %662 = vmatprep.subr.mxu0 0.0
    %663 = vmatpush1.msra.mxu0 %v243
    %664 = vmatprep.subr.mxu0 0.0
    %665 = vmatpush1.msra.mxu0 %v244
    %666 = vmatprep.subr.mxu0 0.0
    %667 = vmatpush1.msra.mxu0 0.0
    %668 = vmatprep.subr.mxu0 0.0
    %669 = vmatpush1.msra.mxu0 0.0
    %670 = vmatprep.subr.mxu0 0.0
    %671 = vmatpush1.msra.mxu0 0.0
    %672 = vmatprep.subr.mxu0 0.0
    %673 = vmatpush1.msra.mxu0 0.0
    %674 = vmatprep.subr.mxu0 0.0
    %675 = vmatpush1.msra.mxu0 0.0
    %676 = vmatprep.subr.mxu0 0.0
    %677 = vmatpush1.msra.mxu0 0.0
    %678 = vmatprep.subr.mxu0 0.0
    %679 = vmatpush1.msra.mxu0 0.0
    %680 = vmatprep.subr.mxu0 0.0
    %681 = vmatpush1.msra.mxu0 0.0
    %682 = vmatprep.subr.mxu0 0.0
    %683 = vmatpush1.msra.mxu0 0.0
    %684 = vmatprep.subr.mxu0 0.0
    %685 = vmatpush1.msra.mxu0 0.0
    %686 = vmatprep.subr.mxu0 0.0
    %687 = vmatpush1.msra.mxu0 0.0
    %688 = vmatprep.subr.mxu0 0.0
    %689 = vmatpush1.msra.mxu0 0.0
    %690 = vmatprep.subr.mxu0 0.0
    %691 = vmatpush1.msra.mxu0 0.0
    %692 = vmatprep.subr.mxu0 0.0
    %693 = vmatpush1.msra.mxu0 0.0
    %694 = vmatprep.subr.mxu0 0.0
    %695 = vmatpush1.msra.mxu0 0.0
    %696 = vmatprep.subr.mxu0 0.0
    %697 = vmatpush1.msra.mxu0 0.0
    %698 = vmatprep.mubr.f32.mxu0 0.0
    %699 = vmatmul.mubr.f32.gmra.mrb[0].mxu0 %v633
    %v700 = vpop.f32.mrb[0].mxu0
    %v701 = vadd.f32 0.0, %v700
    %v702 = vpop.f32.mrb[0].mxu0
    %703 = vdwg.mxu0
    %v704 = vadd.f32 %v211, %v701
    %v705 = vmul.f32 %v704, %v78
    %v706 = vtanh.pop %v705
    %v707 = vmul.f32 %v78, %v706
    %v708 = vadd.f32 %v707, %v79
    %v709 = vmul.f32 %v708, %v622
    %711 = vrot.lane.b32.xlu0 %v708, 96
    %v712 = vpop.permute.xlu0 %711
    %v714 = vmul.f32 %v708, %v712
    %716 = vrot.lane.b32.xlu0 %v714, 16
    %v717 = vpop.permute.xlu0 %716
    %v719 = vadd.f32 %v709, %v717
    %v720 = vtanh.pop %v719
    %722 = vrot.lane.b32.xlu0 %v720, 32
    %v723 = vpop.permute.xlu0 %722
    %v725 = vmul.f32 %v708, %v723
    %727 = vrot.lane.b32.xlu0 %v725, 80
    %v728 = vpop.permute.xlu0 %727
    %v730 = vsel %vm341, %v728, 0.0
    %731 = vmatprep.subr.mxu0 0.0
    %732 = vmatpush1.msra.mxu0 %v229
    %733 = vmatprep.subr.mxu0 0.0
    %734 = vmatpush1.msra.mxu0 %v230
    %735 = vmatprep.subr.mxu0 0.0
    %736 = vmatpush1.msra.mxu0 %v231
    %737 = vmatprep.subr.mxu0 0.0
    %738 = vmatpush1.msra.mxu0 %v232
    %739 = vmatprep.subr.mxu0 0.0
    %740 = vmatpush1.msra.mxu0 %v233
    %741 = vmatprep.subr.mxu0 0.0
    %742 = vmatpush1.msra.mxu0 %v234
    %743 = vmatprep.subr.mxu0 0.0
    %744 = vmatpush1.msra.mxu0 %v235
    %745 = vmatprep.subr.mxu0 0.0
    %746 = vmatpush1.msra.mxu0 %v236
    %747 = vmatprep.subr.mxu0 0.0
    %748 = vmatpush1.msra.mxu0 %v237
    %749 = vmatprep.subr.mxu0 0.0
    %750 = vmatpush1.msra.mxu0 %v238
    %751 = vmatprep.subr.mxu0 0.0
    %752 = vmatpush1.msra.mxu0 %v239
    %753 = vmatprep.subr.mxu0 0.0
    %754 = vmatpush1.msra.mxu0 %v240
    %755 = vmatprep.subr.mxu0 0.0
    %756 = vmatpush1.msra.mxu0 %v241
    %757 = vmatprep.subr.mxu0 0.0
    %758 = vmatpush1.msra.mxu0 %v242
    %759 = vmatprep.subr.mxu0 0.0
    %760 = vmatpush1.msra.mxu0 %v243
    %761 = vmatprep.subr.mxu0 0.0
    %762 = vmatpush1.msra.mxu0 %v244
    %763 = vmatprep.subr.mxu0 0.0
    %764 = vmatpush1.msra.mxu0 0.0
    %765 = vmatprep.subr.mxu0 0.0
    %766 = vmatpush1.msra.mxu0 0.0
    %767 = vmatprep.subr.mxu0 0.0
    %768 = vmatpush1.msra.mxu0 0.0
    %769 = vmatprep.subr.mxu0 0.0
    %770 = vmatpush1.msra.mxu0 0.0
    %771 = vmatprep.subr.mxu0 0.0
    %772 = vmatpush1.msra.mxu0 0.0
    %773 = vmatprep.subr.mxu0 0.0
    %774 = vmatpush1.msra.mxu0 0.0
    %775 = vmatprep.subr.mxu0 0.0
    %776 = vmatpush1.msra.mxu0 0.0
    %777 = vmatprep.subr.mxu0 0.0
    %778 = vmatpush1.msra.mxu0 0.0
    %779 = vmatprep.subr.mxu0 0.0
    %780 = vmatpush1.msra.mxu0 0.0
    %781 = vmatprep.subr.mxu0 0.0
    %782 = vmatpush1.msra.mxu0 0.0
    %783 = vmatprep.subr.mxu0 0.0
    %784 = vmatpush1.msra.mxu0 0.0
    %785 = vmatprep.subr.mxu0 0.0
    %786 = vmatpush1.msra.mxu0 0.0
    %787 = vmatprep.subr.mxu0 0.0
    %788 = vmatpush1.msra.mxu0 0.0
    %789 = vmatprep.subr.mxu0 0.0
    %790 = vmatpush1.msra.mxu0 0.0
    %791 = vmatprep.subr.mxu0 0.0
    %792 = vmatpush1.msra.mxu0 0.0
    %793 = vmatprep.subr.mxu0 0.0
    %794 = vmatpush1.msra.mxu0 0.0
    %795 = vmatprep.mubr.f32.mxu0 0.0
    %796 = vmatmul.mubr.f32.gmra.mrb[0].mxu0 %v730
    %v797 = vpop.f32.mrb[0].mxu0
    %v798 = vadd.f32 0.0, %v797
    %v799 = vpop.f32.mrb[0].mxu0
    %800 = vdwg.mxu0
    %v801 = vadd.f32 %v216, %v798
    %v802 = vmul.f32 %v801, %v78
    %v803 = vtanh.pop %v802
    %v804 = vmul.f32 %v78, %v803
    %v805 = vadd.f32 %v804, %v79
    %v806 = vmul.f32 %v805, %v719
    %808 = vrot.lane.b32.xlu0 %v805, 96
    %v809 = vpop.permute.xlu0 %808
    %v811 = vmul.f32 %v805, %v809
    %813 = vrot.lane.b32.xlu0 %v811, 16
    %v814 = vpop.permute.xlu0 %813
    %v816 = vadd.f32 %v806, %v814
    %v817 = vtanh.pop %v816
    %819 = vrot.lane.b32.xlu0 %v817, 32
    %v820 = vpop.permute.xlu0 %819
    %v822 = vmul.f32 %v805, %v820
    %824 = vrot.lane.b32.xlu0 %v822, 80
    %v825 = vpop.permute.xlu0 %824
    %v827 = vsel %vm341, %v825, 0.0
    %828 = vmatprep.subr.mxu0 0.0
    %829 = vmatpush1.msra.mxu0 %v229
    %830 = vmatprep.subr.mxu0 0.0
    %831 = vmatpush1.msra.mxu0 %v230
    %832 = vmatprep.subr.mxu0 0.0
    %833 = vmatpush1.msra.mxu0 %v231
    %834 = vmatprep.subr.mxu0 0.0
    %835 = vmatpush1.msra.mxu0 %v232
    %836 = vmatprep.subr.mxu0 0.0
    %837 = vmatpush1.msra.mxu0 %v233
    %838 = vmatprep.subr.mxu0 0.0
    %839 = vmatpush1.msra.mxu0 %v234
    %840 = vmatprep.subr.mxu0 0.0
    %841 = vmatpush1.msra.mxu0 %v235
    %842 = vmatprep.subr.mxu0 0.0
    %843 = vmatpush1.msra.mxu0 %v236
    %844 = vmatprep.subr.mxu0 0.0
    %845 = vmatpush1.msra.mxu0 %v237
    %846 = vmatprep.subr.mxu0 0.0
    %847 = vmatpush1.msra.mxu0 %v238
    %848 = vmatprep.subr.mxu0 0.0
    %849 = vmatpush1.msra.mxu0 %v239
    %850 = vmatprep.subr.mxu0 0.0
    %851 = vmatpush1.msra.mxu0 %v240
    %852 = vmatprep.subr.mxu0 0.0
    %853 = vmatpush1.msra.mxu0 %v241
    %854 = vmatprep.subr.mxu0 0.0
    %855 = vmatpush1.msra.mxu0 %v242
    %856 = vmatprep.subr.mxu0 0.0
    %857 = vmatpush1.msra.mxu0 %v243
    %858 = vmatprep.subr.mxu0 0.0
    %859 = vmatpush1.msra.mxu0 %v244
    %860 = vmatprep.subr.mxu0 0.0
    %861 = vmatpush1.msra.mxu0 0.0
    %862 = vmatprep.subr.mxu0 0.0
    %863 = vmatpush1.msra.mxu0 0.0
    %864 = vmatprep.subr.mxu0 0.0
    %865 = vmatpush1.msra.mxu0 0.0
    %866 = vmatprep.subr.mxu0 0.0
    %867 = vmatpush1.msra.mxu0 0.0
    %868 = vmatprep.subr.mxu0 0.0
    %869 = vmatpush1.msra.mxu0 0.0
    %870 = vmatprep.subr.mxu0 0.0
    %871 = vmatpush1.msra.mxu0 0.0
    %872 = vmatprep.subr.mxu0 0.0
    %873 = vmatpush1.msra.mxu0 0.0
    %874 = vmatprep.subr.mxu0 0.0
    %875 = vmatpush1.msra.mxu0 0.0
    %876 = vmatprep.subr.mxu0 0.0
    %877 = vmatpush1.msra.mxu0 0.0
    %878 = vmatprep.subr.mxu0 0.0
    %879 = vmatpush1.msra.mxu0 0.0
    %880 = vmatprep.subr.mxu0 0.0
    %881 = vmatpush1.msra.mxu0 0.0
    %882 = vmatprep.subr.mxu0 0.0
    %883 = vmatpush1.msra.mxu0 0.0
    %884 = vmatprep.subr.mxu0 0.0
    %885 = vmatpush1.msra.mxu0 0.0
    %886 = vmatprep.subr.mxu0 0.0
    %887 = vmatpush1.msra.mxu0 0.0
    %888 = vmatprep.subr.mxu0 0.0
    %889 = vmatpush1.msra.mxu0 0.0
    %890 = vmatprep.subr.mxu0 0.0
    %891 = vmatpush1.msra.mxu0 0.0
    %892 = vmatprep.mubr.f32.mxu0 0.0
    %893 = vmatmul.mubr.f32.gmra.mrb[0].mxu0 %v827
    %v894 = vpop.f32.mrb[0].mxu0
    %v895 = vadd.f32 0.0, %v894
    %v896 = vpop.f32.mrb[0].mxu0
    %897 = vdwg.mxu0
    %v898 = vadd.f32 %v221, %v895
    %v899 = vmul.f32 %v898, %v78
    %v900 = vtanh.pop %v899
    %v901 = vmul.f32 %v78, %v900
    %v902 = vadd.f32 %v901, %v79
    %v903 = vmul.f32 %v902, %v816
    %905 = vrot.lane.b32.xlu0 %v902, 96
    %v906 = vpop.permute.xlu0 %905
    %v908 = vmul.f32 %v902, %v906
    %910 = vrot.lane.b32.xlu0 %v908, 16
    %v911 = vpop.permute.xlu0 %910
    %v913 = vadd.f32 %v903, %v911
    %v914 = vtanh.pop %v913
    %916 = vrot.lane.b32.xlu0 %v914, 32
    %v917 = vpop.permute.xlu0 %916
    %v919 = vmul.f32 %v902, %v917
    %921 = vrot.lane.b32.xlu0 %v919, 80
    %v922 = vpop.permute.xlu0 %921
    %v924 = vsel %vm341, %v922, 0.0
    %925 = vmatprep.subr.mxu0 0.0
    %926 = vmatpush1.msra.mxu0 %v229
    %927 = vmatprep.subr.mxu0 0.0
    %928 = vmatpush1.msra.mxu0 %v230
    %929 = vmatprep.subr.mxu0 0.0
    %930 = vmatpush1.msra.mxu0 %v231
    %931 = vmatprep.subr.mxu0 0.0
    %932 = vmatpush1.msra.mxu0 %v232
    %933 = vmatprep.subr.mxu0 0.0
    %934 = vmatpush1.msra.mxu0 %v233
    %935 = vmatprep.subr.mxu0 0.0
    %936 = vmatpush1.msra.mxu0 %v234
    %937 = vmatprep.subr.mxu0 0.0
    %938 = vmatpush1.msra.mxu0 %v235
    %939 = vmatprep.subr.mxu0 0.0
    %940 = vmatpush1.msra.mxu0 %v236
    %941 = vmatprep.subr.mxu0 0.0
    %942 = vmatpush1.msra.mxu0 %v237
    %943 = vmatprep.subr.mxu0 0.0
    %944 = vmatpush1.msra.mxu0 %v238
    %945 = vmatprep.subr.mxu0 0.0
    %946 = vmatpush1.msra.mxu0 %v239
    %947 = vmatprep.subr.mxu0 0.0
    %948 = vmatpush1.msra.mxu0 %v240
    %949 = vmatprep.subr.mxu0 0.0
    %950 = vmatpush1.msra.mxu0 %v241
    %951 = vmatprep.subr.mxu0 0.0
    %952 = vmatpush1.msra.mxu0 %v242
    %953 = vmatprep.subr.mxu0 0.0
    %954 = vmatpush1.msra.mxu0 %v243
    %955 = vmatprep.subr.mxu0 0.0
    %956 = vmatpush1.msra.mxu0 %v244
    %957 = vmatprep.subr.mxu0 0.0
    %958 = vmatpush1.msra.mxu0 0.0
    %959 = vmatprep.subr.mxu0 0.0
    %960 = vmatpush1.msra.mxu0 0.0
    %961 = vmatprep.subr.mxu0 0.0
    %962 = vmatpush1.msra.mxu0 0.0
    %963 = vmatprep.subr.mxu0 0.0
    %964 = vmatpush1.msra.mxu0 0.0
    %965 = vmatprep.subr.mxu0 0.0
    %966 = vmatpush1.msra.mxu0 0.0
    %967 = vmatprep.subr.mxu0 0.0
    %968 = vmatpush1.msra.mxu0 0.0
    %969 = vmatprep.subr.mxu0 0.0
    %970 = vmatpush1.msra.mxu0 0.0
    %971 = vmatprep.subr.mxu0 0.0
    %972 = vmatpush1.msra.mxu0 0.0
    %973 = vmatprep.subr.mxu0 0.0
    %974 = vmatpush1.msra.mxu0 0.0
    %975 = vmatprep.subr.mxu0 0.0
    %976 = vmatpush1.msra.mxu0 0.0
    %977 = vmatprep.subr.mxu0 0.0
    %978 = vmatpush1.msra.mxu0 0.0
    %979 = vmatprep.subr.mxu0 0.0
    %980 = vmatpush1.msra.mxu0 0.0
    %981 = vmatprep.subr.mxu0 0.0
    %982 = vmatpush1.msra.mxu0 0.0
    %983 = vmatprep.subr.mxu0 0.0
    %984 = vmatpush1.msra.mxu0 0.0
    %985 = vmatprep.subr.mxu0 0.0
    %986 = vmatpush1.msra.mxu0 0.0
    %987 = vmatprep.subr.mxu0 0.0
    %988 = vmatpush1.msra.mxu0 0.0
    %989 = vmatprep.mubr.f32.mxu0 0.0
    %990 = vmatmul.mubr.f32.gmra.mrb[0].mxu0 %v924
    %v991 = vpop.f32.mrb[0].mxu0
    %v992 = vadd.f32 0.0, %v991
    %v993 = vpop.f32.mrb[0].mxu0
    %994 = vdwg.mxu0
    %v995 = vadd.f32 %v226, %v992
    %v996 = vmul.f32 %v995, %v78
    %v997 = vtanh.pop %v996
    %v998 = vmul.f32 %v78, %v997
    %v999 = vadd.f32 %v998, %v79
    %v1000 = vmul.f32 %v999, %v913
    %1002 = vrot.lane.b32.xlu0 %v999, 96
    %v1003 = vpop.permute.xlu0 %1002
    %v1005 = vmul.f32 %v999, %v1003
    %1007 = vrot.lane.b32.xlu0 %v1005, 16
    %v1008 = vpop.permute.xlu0 %1007
    %v1010 = vadd.f32 %v1000, %v1008
    %v1011 = vtanh.pop %v1010
    %1013 = vrot.lane.b32.xlu0 %v1011, 32
    %v1014 = vpop.permute.xlu0 %1013
    %v1016 = vmul.f32 %v999, %v1014
    %1018 = vrot.lane.b32.xlu0 %v1016, 80
    %v1019 = vpop.permute.xlu0 %1018
    %v1021 = vsel %vm341, %v1019, 0.0
    %v1022 = vld [vmem:[#allocation4] sm:$0xff]
    %v1023 = vld [vmem:[#allocation4 + $0x8] sm:$0xff]
    %v1024 = vld [vmem:[#allocation4 + $0x10] sm:$0xff]
    %v1025 = vld [vmem:[#allocation4 + $0x18] sm:$0xff]
    %v1026 = vld [vmem:[#allocation4 + $0x20] sm:$0xff]
    %v1027 = vld [vmem:[#allocation4 + $0x28] sm:$0xff]
    %v1028 = vld [vmem:[#allocation4 + $0x30] sm:$0xff]
    %v1029 = vld [vmem:[#allocation4 + $0x38] sm:$0xff]
    %v1030 = vld [vmem:[#allocation4 + $0x40] sm:$0xff]
    %v1031 = vld [vmem:[#allocation4 + $0x48] sm:$0xff]
    %v1032 = vld [vmem:[#allocation4 + $0x50] sm:$0xff]
    %v1033 = vld [vmem:[#allocation4 + $0x58] sm:$0xff]
    %v1034 = vld [vmem:[#allocation4 + $0x60] sm:$0xff]
    %v1035 = vld [vmem:[#allocation4 + $0x68] sm:$0xff]
    %v1036 = vld [vmem:[#allocation4 + $0x70] sm:$0xff]
    %v1037 = vld [vmem:[#allocation4 + $0x78] sm:$0xff]
    %v1038 = vld [vmem:[#allocation2] sm:$0xff]
    %v1039 = vld [vmem:[#allocation2 + $0x8] sm:$0xff]
    %v1040 = vld [vmem:[#allocation2 + $0x10] sm:$0xff]
    %v1041 = vld [vmem:[#allocation2 + $0x18] sm:$0xff]
    %v1042 = vld [vmem:[#allocation2 + $0x20] sm:$0xff]
    %v1043 = vld [vmem:[#allocation2 + $0x28] sm:$0xff]
    %v1044 = vld [vmem:[#allocation2 + $0x30] sm:$0xff]
    %v1045 = vld [vmem:[#allocation2 + $0x38] sm:$0xff]
    %v1046 = vld [vmem:[#allocation2 + $0x40] sm:$0xff]
    %v1047 = vld [vmem:[#allocation2 + $0x48] sm:$0xff]
    %v1048 = vld [vmem:[#allocation2 + $0x50] sm:$0xff]
    %v1049 = vld [vmem:[#allocation2 + $0x58] sm:$0xff]
    %v1050 = vld [vmem:[#allocation2 + $0x60] sm:$0xff]
    %v1051 = vld [vmem:[#allocation2 + $0x68] sm:$0xff]
    %v1052 = vld [vmem:[#allocation2 + $0x70] sm:$0xff]
    %v1053 = vld [vmem:[#allocation2 + $0x78] sm:$0xff]
    %v1054 = vld [vmem:[%s6] sm:$0x1]
    %v1056 = vlaneseq
    %v1057 = vshrl.u32 %v1056, 7
    %v1058 = vsub.s32 0, %v1057
    %v1059 = vrot.slane %v1054, %v1058
    %1061 = vmatprep.subr.mxu0 0.0
    %1062 = vmatpush1.msra.mxu0 %v1038
    %1063 = vmatprep.subr.mxu0 0.0
    %1064 = vmatpush1.msra.mxu0 %v1039
    %1065 = vmatprep.subr.mxu0 0.0
    %1066 = vmatpush1.msra.mxu0 %v1040
    %1067 = vmatprep.subr.mxu0 0.0
    %1068 = vmatpush1.msra.mxu0 %v1041
    %1069 = vmatprep.subr.mxu0 0.0
    %1070 = vmatpush1.msra.mxu0 %v1042
    %1071 = vmatprep.subr.mxu0 0.0
    %1072 = vmatpush1.msra.mxu0 %v1043
    %1073 = vmatprep.subr.mxu0 0.0
    %1074 = vmatpush1.msra.mxu0 %v1044
    %1075 = vmatprep.subr.mxu0 0.0
    %1076 = vmatpush1.msra.mxu0 %v1045
    %1077 = vmatprep.subr.mxu0 0.0
    %1078 = vmatpush1.msra.mxu0 %v1046
    %1079 = vmatprep.subr.mxu0 0.0
    %1080 = vmatpush1.msra.mxu0 %v1047
    %1081 = vmatprep.subr.mxu0 0.0
    %1082 = vmatpush1.msra.mxu0 %v1048
    %1083 = vmatprep.subr.mxu0 0.0
    %1084 = vmatpush1.msra.mxu0 %v1049
    %1085 = vmatprep.subr.mxu0 0.0
    %1086 = vmatpush1.msra.mxu0 %v1050
    %1087 = vmatprep.subr.mxu0 0.0
    %1088 = vmatpush1.msra.mxu0 %v1051
    %1089 = vmatprep.subr.mxu0 0.0
    %1090 = vmatpush1.msra.mxu0 %v1052
    %1091 = vmatprep.subr.mxu0 0.0
    %1092 = vmatpush1.msra.mxu0 %v1053
    %1093 = vmatprep.subr.mxu0 0.0
    %1094 = vmatpush1.msra.mxu0 0.0
    %1095 = vmatprep.subr.mxu0 0.0
    %1096 = vmatpush1.msra.mxu0 0.0
    %1097 = vmatprep.subr.mxu0 0.0
    %1098 = vmatpush1.msra.mxu0 0.0
    %1099 = vmatprep.subr.mxu0 0.0
    %1100 = vmatpush1.msra.mxu0 0.0
    %1101 = vmatprep.subr.mxu0 0.0
    %1102 = vmatpush1.msra.mxu0 0.0
    %1103 = vmatprep.subr.mxu0 0.0
    %1104 = vmatpush1.msra.mxu0 0.0
    %1105 = vmatprep.subr.mxu0 0.0
    %1106 = vmatpush1.msra.mxu0 0.0
    %1107 = vmatprep.subr.mxu0 0.0
    %1108 = vmatpush1.msra.mxu0 0.0
    %1109 = vmatprep.subr.mxu0 0.0
    %1110 = vmatpush1.msra.mxu0 0.0
    %1111 = vmatprep.subr.mxu0 0.0
    %1112 = vmatpush1.msra.mxu0 0.0
    %1113 = vmatprep.subr.mxu0 0.0
    %1114 = vmatpush1.msra.mxu0 0.0
    %1115 = vmatprep.subr.mxu0 0.0
    %1116 = vmatpush1.msra.mxu0 0.0
    %1117 = vmatprep.subr.mxu0 0.0
    %1118 = vmatpush1.msra.mxu0 0.0
    %1119 = vmatprep.subr.mxu0 0.0
    %1120 = vmatpush1.msra.mxu0 0.0
    %1121 = vmatprep.subr.mxu0 0.0
    %1122 = vmatpush1.msra.mxu0 0.0
    %1123 = vmatprep.subr.mxu0 0.0
    %1124 = vmatpush1.msra.mxu0 0.0
    %1125 = vmatprep.mubr.f32.mxu0 0.0
    %1126 = vmatmul.mubr.f32.gmra.mrb[0].mxu0 %v342
    %v1127 = vpop.f32.mrb[0].mxu0
    %v1128 = vadd.f32 %v1059, %v1127
    %v1129 = vpop.f32.mrb[0].mxu0
    %1130 = vdwg.mxu0
    %1131 = vmatprep.subr.mxu0 0.0
    %1132 = vmatpush1.msra.mxu0 %v1022
    %1133 = vmatprep.subr.mxu0 0.0
    %1134 = vmatpush1.msra.mxu0 %v1023
    %1135 = vmatprep.subr.mxu0 0.0
    %1136 = vmatpush1.msra.mxu0 %v1024
    %1137 = vmatprep.subr.mxu0 0.0
    %1138 = vmatpush1.msra.mxu0 %v1025
    %1139 = vmatprep.subr.mxu0 0.0
    %1140 = vmatpush1.msra.mxu0 %v1026
    %1141 = vmatprep.subr.mxu0 0.0
    %1142 = vmatpush1.msra.mxu0 %v1027
    %1143 = vmatprep.subr.mxu0 0.0
    %1144 = vmatpush1.msra.mxu0 %v1028
    %1145 = vmatprep.subr.mxu0 0.0
    %1146 = vmatpush1.msra.mxu0 %v1029
    %1147 = vmatprep.subr.mxu0 0.0
    %1148 = vmatpush1.msra.mxu0 %v1030
    %1149 = vmatprep.subr.mxu0 0.0
    %1150 = vmatpush1.msra.mxu0 %v1031
    %1151 = vmatprep.subr.mxu0 0.0
    %1152 = vmatpush1.msra.mxu0 %v1032
    %1153 = vmatprep.subr.mxu0 0.0
    %1154 = vmatpush1.msra.mxu0 %v1033
    %1155 = vmatprep.subr.mxu0 0.0
    %1156 = vmatpush1.msra.mxu0 %v1034
    %1157 = vmatprep.subr.mxu0 0.0
    %1158 = vmatpush1.msra.mxu0 %v1035
    %1159 = vmatprep.subr.mxu0 0.0
    %1160 = vmatpush1.msra.mxu0 %v1036
    %1161 = vmatprep.subr.mxu0 0.0
    %1162 = vmatpush1.msra.mxu0 %v1037
    %1163 = vmatprep.subr.mxu0 0.0
    %1164 = vmatpush1.msra.mxu0 0.0
    %1165 = vmatprep.subr.mxu0 0.0
    %1166 = vmatpush1.msra.mxu0 0.0
    %1167 = vmatprep.subr.mxu0 0.0
    %1168 = vmatpush1.msra.mxu0 0.0
    %1169 = vmatprep.subr.mxu0 0.0
    %1170 = vmatpush1.msra.mxu0 0.0
    %1171 = vmatprep.subr.mxu0 0.0
    %1172 = vmatpush1.msra.mxu0 0.0
    %1173 = vmatprep.subr.mxu0 0.0
    %1174 = vmatpush1.msra.mxu0 0.0
    %1175 = vmatprep.subr.mxu0 0.0
    %1176 = vmatpush1.msra.mxu0 0.0
    %1177 = vmatprep.subr.mxu0 0.0
    %1178 = vmatpush1.msra.mxu0 0.0
    %1179 = vmatprep.subr.mxu0 0.0
    %1180 = vmatpush1.msra.mxu0 0.0
    %1181 = vmatprep.subr.mxu0 0.0
    %1182 = vmatpush1.msra.mxu0 0.0
    %1183 = vmatprep.subr.mxu0 0.0
    %1184 = vmatpush1.msra.mxu0 0.0
    %1185 = vmatprep.subr.mxu0 0.0
    %1186 = vmatpush1.msra.mxu0 0.0
    %1187 = vmatprep.subr.mxu0 0.0
    %1188 = vmatpush1.msra.mxu0 0.0
    %1189 = vmatprep.subr.mxu0 0.0
    %1190 = vmatpush1.msra.mxu0 0.0
    %1191 = vmatprep.subr.mxu0 0.0
    %1192 = vmatpush1.msra.mxu0 0.0
    %1193 = vmatprep.subr.mxu0 0.0
    %1194 = vmatpush1.msra.mxu0 0.0
    %1195 = vmatprep.mubr.f32.mxu0 0.0
    %1196 = vmatmul.mubr.f32.gmra.mrb[0].mxu0 0.0
    %v1197 = vpop.f32.mrb[0].mxu0
    %v1198 = vadd.f32 0.0, %v1197
    %v1199 = vpop.f32.mrb[0].mxu0
    %1200 = vdwg.mxu0
    %v1201 = vadd.f32 %v1128, %v1198
    %v1202 = vmul.f32 %v1201, %v78
    %v1203 = vtanh.pop %v1202
    %v1204 = vmul.f32 %v78, %v1203
    %v1205 = vadd.f32 %v1204, %v79
    %v1206 = vmul.f32 %v1205, 0.0
    %1208 = vrot.lane.b32.xlu0 %v1205, 96
    %v1209 = vpop.permute.xlu0 %1208
    %v1211 = vmul.f32 %v1205, %v1209
    %1213 = vrot.lane.b32.xlu0 %v1211, 16
    %v1214 = vpop.permute.xlu0 %1213
    %v1216 = vadd.f32 %v1206, %v1214
    %v1217 = vtanh.pop %v1216
    %1219 = vrot.lane.b32.xlu0 %v1217, 32
    %v1220 = vpop.permute.xlu0 %1219
    %v1222 = vmul.f32 %v1205, %v1220
    %1224 = vrot.lane.b32.xlu0 %v1222, 80
    %v1225 = vpop.permute.xlu0 %1224
    %v1227 = vsel %vm341, %v1225, 0.0
    %1228 = vmatprep.subr.mxu0 0.0
    %1229 = vmatpush1.msra.mxu0 %v1038
    %1230 = vmatprep.subr.mxu0 0.0
    %1231 = vmatpush1.msra.mxu0 %v1039
    %1232 = vmatprep.subr.mxu0 0.0
    %1233 = vmatpush1.msra.mxu0 %v1040
    %1234 = vmatprep.subr.mxu0 0.0
    %1235 = vmatpush1.msra.mxu0 %v1041
    %1236 = vmatprep.subr.mxu0 0.0
    %1237 = vmatpush1.msra.mxu0 %v1042
    %1238 = vmatprep.subr.mxu0 0.0
    %1239 = vmatpush1.msra.mxu0 %v1043
    %1240 = vmatprep.subr.mxu0 0.0
    %1241 = vmatpush1.msra.mxu0 %v1044
    %1242 = vmatprep.subr.mxu0 0.0
    %1243 = vmatpush1.msra.mxu0 %v1045
    %1244 = vmatprep.subr.mxu0 0.0
    %1245 = vmatpush1.msra.mxu0 %v1046
    %1246 = vmatprep.subr.mxu0 0.0
    %1247 = vmatpush1.msra.mxu0 %v1047
    %1248 = vmatprep.subr.mxu0 0.0
    %1249 = vmatpush1.msra.mxu0 %v1048
    %1250 = vmatprep.subr.mxu0 0.0
    %1251 = vmatpush1.msra.mxu0 %v1049
    %1252 = vmatprep.subr.mxu0 0.0
    %1253 = vmatpush1.msra.mxu0 %v1050
    %1254 = vmatprep.subr.mxu0 0.0
    %1255 = vmatpush1.msra.mxu0 %v1051
    %1256 = vmatprep.subr.mxu0 0.0
    %1257 = vmatpush1.msra.mxu0 %v1052
    %1258 = vmatprep.subr.mxu0 0.0
    %1259 = vmatpush1.msra.mxu0 %v1053
    %1260 = vmatprep.subr.mxu0 0.0
    %1261 = vmatpush1.msra.mxu0 0.0
    %1262 = vmatprep.subr.mxu0 0.0
    %1263 = vmatpush1.msra.mxu0 0.0
    %1264 = vmatprep.subr.mxu0 0.0
    %1265 = vmatpush1.msra.mxu0 0.0
    %1266 = vmatprep.subr.mxu0 0.0
    %1267 = vmatpush1.msra.mxu0 0.0
    %1268 = vmatprep.subr.mxu0 0.0
    %1269 = vmatpush1.msra.mxu0 0.0
    %1270 = vmatprep.subr.mxu0 0.0
    %1271 = vmatpush1.msra.mxu0 0.0
    %1272 = vmatprep.subr.mxu0 0.0
    %1273 = vmatpush1.msra.mxu0 0.0
    %1274 = vmatprep.subr.mxu0 0.0
    %1275 = vmatpush1.msra.mxu0 0.0
    %1276 = vmatprep.subr.mxu0 0.0
    %1277 = vmatpush1.msra.mxu0 0.0
    %1278 = vmatprep.subr.mxu0 0.0
    %1279 = vmatpush1.msra.mxu0 0.0
    %1280 = vmatprep.subr.mxu0 0.0
    %1281 = vmatpush1.msra.mxu0 0.0
    %1282 = vmatprep.subr.mxu0 0.0
    %1283 = vmatpush1.msra.mxu0 0.0
    %1284 = vmatprep.subr.mxu0 0.0
    %1285 = vmatpush1.msra.mxu0 0.0
    %1286 = vmatprep.subr.mxu0 0.0
    %1287 = vmatpush1.msra.mxu0 0.0
    %1288 = vmatprep.subr.mxu0 0.0
    %1289 = vmatpush1.msra.mxu0 0.0
    %1290 = vmatprep.subr.mxu0 0.0
    %1291 = vmatpush1.msra.mxu0 0.0
    %1292 = vmatprep.mubr.f32.mxu0 0.0
    %1293 = vmatmul.mubr.f32.gmra.mrb[0].mxu0 %v439
    %v1294 = vpop.f32.mrb[0].mxu0
    %v1295 = vadd.f32 %v1059, %v1294
    %v1296 = vpop.f32.mrb[0].mxu0
    %1297 = vdwg.mxu0
    %1298 = vmatprep.subr.mxu0 0.0
    %1299 = vmatpush1.msra.mxu0 %v1022
    %1300 = vmatprep.subr.mxu0 0.0
    %1301 = vmatpush1.msra.mxu0 %v1023
    %1302 = vmatprep.subr.mxu0 0.0
    %1303 = vmatpush1.msra.mxu0 %v1024
    %1304 = vmatprep.subr.mxu0 0.0
    %1305 = vmatpush1.msra.mxu0 %v1025
    %1306 = vmatprep.subr.mxu0 0.0
    %1307 = vmatpush1.msra.mxu0 %v1026
    %1308 = vmatprep.subr.mxu0 0.0
    %1309 = vmatpush1.msra.mxu0 %v1027
    %1310 = vmatprep.subr.mxu0 0.0
    %1311 = vmatpush1.msra.mxu0 %v1028
    %1312 = vmatprep.subr.mxu0 0.0
    %1313 = vmatpush1.msra.mxu0 %v1029
    %1314 = vmatprep.subr.mxu0 0.0
    %1315 = vmatpush1.msra.mxu0 %v1030
    %1316 = vmatprep.subr.mxu0 0.0
    %1317 = vmatpush1.msra.mxu0 %v1031
    %1318 = vmatprep.subr.mxu0 0.0
    %1319 = vmatpush1.msra.mxu0 %v1032
    %1320 = vmatprep.subr.mxu0 0.0
    %1321 = vmatpush1.msra.mxu0 %v1033
    %1322 = vmatprep.subr.mxu0 0.0
    %1323 = vmatpush1.msra.mxu0 %v1034
    %1324 = vmatprep.subr.mxu0 0.0
    %1325 = vmatpush1.msra.mxu0 %v1035
    %1326 = vmatprep.subr.mxu0 0.0
    %1327 = vmatpush1.msra.mxu0 %v1036
    %1328 = vmatprep.subr.mxu0 0.0
    %1329 = vmatpush1.msra.mxu0 %v1037
    %1330 = vmatprep.subr.mxu0 0.0
    %1331 = vmatpush1.msra.mxu0 0.0
    %1332 = vmatprep.subr.mxu0 0.0
    %1333 = vmatpush1.msra.mxu0 0.0
    %1334 = vmatprep.subr.mxu0 0.0
    %1335 = vmatpush1.msra.mxu0 0.0
    %1336 = vmatprep.subr.mxu0 0.0
    %1337 = vmatpush1.msra.mxu0 0.0
    %1338 = vmatprep.subr.mxu0 0.0
    %1339 = vmatpush1.msra.mxu0 0.0
    %1340 = vmatprep.subr.mxu0 0.0
    %1341 = vmatpush1.msra.mxu0 0.0
    %1342 = vmatprep.subr.mxu0 0.0
    %1343 = vmatpush1.msra.mxu0 0.0
    %1344 = vmatprep.subr.mxu0 0.0
    %1345 = vmatpush1.msra.mxu0 0.0
    %1346 = vmatprep.subr.mxu0 0.0
    %1347 = vmatpush1.msra.mxu0 0.0
    %1348 = vmatprep.subr.mxu0 0.0
    %1349 = vmatpush1.msra.mxu0 0.0
    %1350 = vmatprep.subr.mxu0 0.0
    %1351 = vmatpush1.msra.mxu0 0.0
    %1352 = vmatprep.subr.mxu0 0.0
    %1353 = vmatpush1.msra.mxu0 0.0
    %1354 = vmatprep.subr.mxu0 0.0
    %1355 = vmatpush1.msra.mxu0 0.0
    %1356 = vmatprep.subr.mxu0 0.0
    %1357 = vmatpush1.msra.mxu0 0.0
    %1358 = vmatprep.subr.mxu0 0.0
    %1359 = vmatpush1.msra.mxu0 0.0
    %1360 = vmatprep.subr.mxu0 0.0
    %1361 = vmatpush1.msra.mxu0 0.0
    %1362 = vmatprep.mubr.f32.mxu0 0.0
    %1363 = vmatmul.mubr.f32.gmra.mrb[0].mxu0 %v1227
    %v1364 = vpop.f32.mrb[0].mxu0
    %v1365 = vadd.f32 0.0, %v1364
    %v1366 = vpop.f32.mrb[0].mxu0
    %1367 = vdwg.mxu0
    %v1368 = vadd.f32 %v1295, %v1365
    %v1369 = vmul.f32 %v1368, %v78
    %v1370 = vtanh.pop %v1369
    %v1371 = vmul.f32 %v78, %v1370
    %v1372 = vadd.f32 %v1371, %v79
    %v1373 = vmul.f32 %v1372, %v1216
    %1375 = vrot.lane.b32.xlu0 %v1372, 96
    %v1376 = vpop.permute.xlu0 %1375
    %v1378 = vmul.f32 %v1372, %v1376
    %1380 = vrot.lane.b32.xlu0 %v1378, 16
    %v1381 = vpop.permute.xlu0 %1380
    %v1383 = vadd.f32 %v1373, %v1381
    %v1384 = vtanh.pop %v1383
    %1386 = vrot.lane.b32.xlu0 %v1384, 32
    %v1387 = vpop.permute.xlu0 %1386
    %v1389 = vmul.f32 %v1372, %v1387
    %1391 = vrot.lane.b32.xlu0 %v1389, 80
    %v1392 = vpop.permute.xlu0 %1391
    %v1394 = vsel %vm341, %v1392, 0.0
    %1395 = vmatprep.subr.mxu0 0.0
    %1396 = vmatpush1.msra.mxu0 %v1038
    %1397 = vmatprep.subr.mxu0 0.0
    %1398 = vmatpush1.msra.mxu0 %v1039
    %1399 = vmatprep.subr.mxu0 0.0
    %1400 = vmatpush1.msra.mxu0 %v1040
    %1401 = vmatprep.subr.mxu0 0.0
    %1402 = vmatpush1.msra.mxu0 %v1041
    %1403 = vmatprep.subr.mxu0 0.0
    %1404 = vmatpush1.msra.mxu0 %v1042
    %1405 = vmatprep.subr.mxu0 0.0
    %1406 = vmatpush1.msra.mxu0 %v1043
    %1407 = vmatprep.subr.mxu0 0.0
    %1408 = vmatpush1.msra.mxu0 %v1044
    %1409 = vmatprep.subr.mxu0 0.0
    %1410 = vmatpush1.msra.mxu0 %v1045
    %1411 = vmatprep.subr.mxu0 0.0
    %1412 = vmatpush1.msra.mxu0 %v1046
    %1413 = vmatprep.subr.mxu0 0.0
    %1414 = vmatpush1.msra.mxu0 %v1047
    %1415 = vmatprep.subr.mxu0 0.0
    %1416 = vmatpush1.msra.mxu0 %v1048
    %1417 = vmatprep.subr.mxu0 0.0
    %1418 = vmatpush1.msra.mxu0 %v1049
    %1419 = vmatprep.subr.mxu0 0.0
    %1420 = vmatpush1.msra.mxu0 %v1050
    %1421 = vmatprep.subr.mxu0 0.0
    %1422 = vmatpush1.msra.mxu0 %v1051
    %1423 = vmatprep.subr.mxu0 0.0
    %1424 = vmatpush1.msra.mxu0 %v1052
    %1425 = vmatprep.subr.mxu0 0.0
    %1426 = vmatpush1.msra.mxu0 %v1053
    %1427 = vmatprep.subr.mxu0 0.0
    %1428 = vmatpush1.msra.mxu0 0.0
    %1429 = vmatprep.subr.mxu0 0.0
    %1430 = vmatpush1.msra.mxu0 0.0
    %1431 = vmatprep.subr.mxu0 0.0
    %1432 = vmatpush1.msra.mxu0 0.0
    %1433 = vmatprep.subr.mxu0 0.0
    %1434 = vmatpush1.msra.mxu0 0.0
    %1435 = vmatprep.subr.mxu0 0.0
    %1436 = vmatpush1.msra.mxu0 0.0
    %1437 = vmatprep.subr.mxu0 0.0
    %1438 = vmatpush1.msra.mxu0 0.0
    %1439 = vmatprep.subr.mxu0 0.0
    %1440 = vmatpush1.msra.mxu0 0.0
    %1441 = vmatprep.subr.mxu0 0.0
    %1442 = vmatpush1.msra.mxu0 0.0
    %1443 = vmatprep.subr.mxu0 0.0
    %1444 = vmatpush1.msra.mxu0 0.0
    %1445 = vmatprep.subr.mxu0 0.0
    %1446 = vmatpush1.msra.mxu0 0.0
    %1447 = vmatprep.subr.mxu0 0.0
    %1448 = vmatpush1.msra.mxu0 0.0
    %1449 = vmatprep.subr.mxu0 0.0
    %1450 = vmatpush1.msra.mxu0 0.0
    %1451 = vmatprep.subr.mxu0 0.0
    %1452 = vmatpush1.msra.mxu0 0.0
    %1453 = vmatprep.subr.mxu0 0.0
    %1454 = vmatpush1.msra.mxu0 0.0
    %1455 = vmatprep.subr.mxu0 0.0
    %1456 = vmatpush1.msra.mxu0 0.0
    %1457 = vmatprep.subr.mxu0 0.0
    %1458 = vmatpush1.msra.mxu0 0.0
    %1459 = vmatprep.mubr.f32.mxu0 0.0
    %1460 = vmatmul.mubr.f32.gmra.mrb[0].mxu0 %v536
    %v1461 = vpop.f32.mrb[0].mxu0
    %v1462 = vadd.f32 %v1059, %v1461
    %v1463 = vpop.f32.mrb[0].mxu0
    %1464 = vdwg.mxu0
    %1465 = vmatprep.subr.mxu0 0.0
    %1466 = vmatpush1.msra.mxu0 %v1022
    %1467 = vmatprep.subr.mxu0 0.0
    %1468 = vmatpush1.msra.mxu0 %v1023
    %1469 = vmatprep.subr.mxu0 0.0
    %1470 = vmatpush1.msra.mxu0 %v1024
    %1471 = vmatprep.subr.mxu0 0.0
    %1472 = vmatpush1.msra.mxu0 %v1025
    %1473 = vmatprep.subr.mxu0 0.0
    %1474 = vmatpush1.msra.mxu0 %v1026
    %1475 = vmatprep.subr.mxu0 0.0
    %1476 = vmatpush1.msra.mxu0 %v1027
    %1477 = vmatprep.subr.mxu0 0.0
    %1478 = vmatpush1.msra.mxu0 %v1028
    %1479 = vmatprep.subr.mxu0 0.0
    %1480 = vmatpush1.msra.mxu0 %v1029
    %1481 = vmatprep.subr.mxu0 0.0
    %1482 = vmatpush1.msra.mxu0 %v1030
    %1483 = vmatprep.subr.mxu0 0.0
    %1484 = vmatpush1.msra.mxu0 %v1031
    %1485 = vmatprep.subr.mxu0 0.0
    %1486 = vmatpush1.msra.mxu0 %v1032
    %1487 = vmatprep.subr.mxu0 0.0
    %1488 = vmatpush1.msra.mxu0 %v1033
    %1489 = vmatprep.subr.mxu0 0.0
    %1490 = vmatpush1.msra.mxu0 %v1034
    %1491 = vmatprep.subr.mxu0 0.0
    %1492 = vmatpush1.msra.mxu0 %v1035
    %1493 = vmatprep.subr.mxu0 0.0
    %1494 = vmatpush1.msra.mxu0 %v1036
    %1495 = vmatprep.subr.mxu0 0.0
    %1496 = vmatpush1.msra.mxu0 %v1037
    %1497 = vmatprep.subr.mxu0 0.0
    %1498 = vmatpush1.msra.mxu0 0.0
    %1499 = vmatprep.subr.mxu0 0.0
    %1500 = vmatpush1.msra.mxu0 0.0
    %1501 = vmatprep.subr.mxu0 0.0
    %1502 = vmatpush1.msra.mxu0 0.0
    %1503 = vmatprep.subr.mxu0 0.0
    %1504 = vmatpush1.msra.mxu0 0.0
    %1505 = vmatprep.subr.mxu0 0.0
    %1506 = vmatpush1.msra.mxu0 0.0
    %1507 = vmatprep.subr.mxu0 0.0
    %1508 = vmatpush1.msra.mxu0 0.0
    %1509 = vmatprep.subr.mxu0 0.0
    %1510 = vmatpush1.msra.mxu0 0.0
    %1511 = vmatprep.subr.mxu0 0.0
    %1512 = vmatpush1.msra.mxu0 0.0
    %1513 = vmatprep.subr.mxu0 0.0
    %1514 = vmatpush1.msra.mxu0 0.0
    %1515 = vmatprep.subr.mxu0 0.0
    %1516 = vmatpush1.msra.mxu0 0.0
    %1517 = vmatprep.subr.mxu0 0.0
    %1518 = vmatpush1.msra.mxu0 0.0
    %1519 = vmatprep.subr.mxu0 0.0
    %1520 = vmatpush1.msra.mxu0 0.0
    %1521 = vmatprep.subr.mxu0 0.0
    %1522 = vmatpush1.msra.mxu0 0.0
    %1523 = vmatprep.subr.mxu0 0.0
    %1524 = vmatpush1.msra.mxu0 0.0
    %1525 = vmatprep.subr.mxu0 0.0
    %1526 = vmatpush1.msra.mxu0 0.0
    %1527 = vmatprep.subr.mxu0 0.0
    %1528 = vmatpush1.msra.mxu0 0.0
    %1529 = vmatprep.mubr.f32.mxu0 0.0
    %1530 = vmatmul.mubr.f32.gmra.mrb[0].mxu0 %v1394
    %v1531 = vpop.f32.mrb[0].mxu0
    %v1532 = vadd.f32 0.0, %v1531
    %v1533 = vpop.f32.mrb[0].mxu0
    %1534 = vdwg.mxu0
    %v1535 = vadd.f32 %v1462, %v1532
    %v1536 = vmul.f32 %v1535, %v78
    %v1537 = vtanh.pop %v1536
    %v1538 = vmul.f32 %v78, %v1537
    %v1539 = vadd.f32 %v1538, %v79
    %v1540 = vmul.f32 %v1539, %v1383
    %1542 = vrot.lane.b32.xlu0 %v1539, 96
    %v1543 = vpop.permute.xlu0 %1542
    %v1545 = vmul.f32 %v1539, %v1543
    %1547 = vrot.lane.b32.xlu0 %v1545, 16
    %v1548 = vpop.permute.xlu0 %1547
    %v1550 = vadd.f32 %v1540, %v1548
    %v1551 = vtanh.pop %v1550
    %1553 = vrot.lane.b32.xlu0 %v1551, 32
    %v1554 = vpop.permute.xlu0 %1553
    %v1556 = vmul.f32 %v1539, %v1554
    %1558 = vrot.lane.b32.xlu0 %v1556, 80
    %v1559 = vpop.permute.xlu0 %1558
    %v1561 = vsel %vm341, %v1559, 0.0
    %1562 = vmatprep.subr.mxu0 0.0
    %1563 = vmatpush1.msra.mxu0 %v1038
    %1564 = vmatprep.subr.mxu0 0.0
    %1565 = vmatpush1.msra.mxu0 %v1039
    %1566 = vmatprep.subr.mxu0 0.0
    %1567 = vmatpush1.msra.mxu0 %v1040
    %1568 = vmatprep.subr.mxu0 0.0
    %1569 = vmatpush1.msra.mxu0 %v1041
    %1570 = vmatprep.subr.mxu0 0.0
    %1571 = vmatpush1.msra.mxu0 %v1042
    %1572 = vmatprep.subr.mxu0 0.0
    %1573 = vmatpush1.msra.mxu0 %v1043
    %1574 = vmatprep.subr.mxu0 0.0
    %1575 = vmatpush1.msra.mxu0 %v1044
    %1576 = vmatprep.subr.mxu0 0.0
    %1577 = vmatpush1.msra.mxu0 %v1045
    %1578 = vmatprep.subr.mxu0 0.0
    %1579 = vmatpush1.msra.mxu0 %v1046
    %1580 = vmatprep.subr.mxu0 0.0
    %1581 = vmatpush1.msra.mxu0 %v1047
    %1582 = vmatprep.subr.mxu0 0.0
    %1583 = vmatpush1.msra.mxu0 %v1048
    %1584 = vmatprep.subr.mxu0 0.0
    %1585 = vmatpush1.msra.mxu0 %v1049
    %1586 = vmatprep.subr.mxu0 0.0
    %1587 = vmatpush1.msra.mxu0 %v1050
    %1588 = vmatprep.subr.mxu0 0.0
    %1589 = vmatpush1.msra.mxu0 %v1051
    %1590 = vmatprep.subr.mxu0 0.0
    %1591 = vmatpush1.msra.mxu0 %v1052
    %1592 = vmatprep.subr.mxu0 0.0
    %1593 = vmatpush1.msra.mxu0 %v1053
    %1594 = vmatprep.subr.mxu0 0.0
    %1595 = vmatpush1.msra.mxu0 0.0
    %1596 = vmatprep.subr.mxu0 0.0
    %1597 = vmatpush1.msra.mxu0 0.0
    %1598 = vmatprep.subr.mxu0 0.0
    %1599 = vmatpush1.msra.mxu0 0.0
    %1600 = vmatprep.subr.mxu0 0.0
    %1601 = vmatpush1.msra.mxu0 0.0
    %1602 = vmatprep.subr.mxu0 0.0
    %1603 = vmatpush1.msra.mxu0 0.0
    %1604 = vmatprep.subr.mxu0 0.0
    %1605 = vmatpush1.msra.mxu0 0.0
    %1606 = vmatprep.subr.mxu0 0.0
    %1607 = vmatpush1.msra.mxu0 0.0
    %1608 = vmatprep.subr.mxu0 0.0
    %1609 = vmatpush1.msra.mxu0 0.0
    %1610 = vmatprep.subr.mxu0 0.0
    %1611 = vmatpush1.msra.mxu0 0.0
    %1612 = vmatprep.subr.mxu0 0.0
    %1613 = vmatpush1.msra.mxu0 0.0
    %1614 = vmatprep.subr.mxu0 0.0
    %1615 = vmatpush1.msra.mxu0 0.0
    %1616 = vmatprep.subr.mxu0 0.0
    %1617 = vmatpush1.msra.mxu0 0.0
    %1618 = vmatprep.subr.mxu0 0.0
    %1619 = vmatpush1.msra.mxu0 0.0
    %1620 = vmatprep.subr.mxu0 0.0
    %1621 = vmatpush1.msra.mxu0 0.0
    %1622 = vmatprep.subr.mxu0 0.0
    %1623 = vmatpush1.msra.mxu0 0.0
    %1624 = vmatprep.subr.mxu0 0.0
    %1625 = vmatpush1.msra.mxu0 0.0
    %1626 = vmatprep.mubr.f32.mxu0 0.0
    %1627 = vmatmul.mubr.f32.gmra.mrb[0].mxu0 %v633
    %v1628 = vpop.f32.mrb[0].mxu0
    %v1629 = vadd.f32 %v1059, %v1628
    %v1630 = vpop.f32.mrb[0].mxu0
    %1631 = vdwg.mxu0
    %1632 = vmatprep.subr.mxu0 0.0
    %1633 = vmatpush1.msra.mxu0 %v1022
    %1634 = vmatprep.subr.mxu0 0.0
    %1635 = vmatpush1.msra.mxu0 %v1023
    %1636 = vmatprep.subr.mxu0 0.0
    %1637 = vmatpush1.msra.mxu0 %v1024
    %1638 = vmatprep.subr.mxu0 0.0
    %1639 = vmatpush1.msra.mxu0 %v1025
    %1640 = vmatprep.subr.mxu0 0.0
    %1641 = vmatpush1.msra.mxu0 %v1026
    %1642 = vmatprep.subr.mxu0 0.0
    %1643 = vmatpush1.msra.mxu0 %v1027
    %1644 = vmatprep.subr.mxu0 0.0
    %1645 = vmatpush1.msra.mxu0 %v1028
    %1646 = vmatprep.subr.mxu0 0.0
    %1647 = vmatpush1.msra.mxu0 %v1029
    %1648 = vmatprep.subr.mxu0 0.0
    %1649 = vmatpush1.msra.mxu0 %v1030
    %1650 = vmatprep.subr.mxu0 0.0
    %1651 = vmatpush1.msra.mxu0 %v1031
    %1652 = vmatprep.subr.mxu0 0.0
    %1653 = vmatpush1.msra.mxu0 %v1032
    %1654 = vmatprep.subr.mxu0 0.0
    %1655 = vmatpush1.msra.mxu0 %v1033
    %1656 = vmatprep.subr.mxu0 0.0
    %1657 = vmatpush1.msra.mxu0 %v1034
    %1658 = vmatprep.subr.mxu0 0.0
    %1659 = vmatpush1.msra.mxu0 %v1035
    %1660 = vmatprep.subr.mxu0 0.0
    %1661 = vmatpush1.msra.mxu0 %v1036
    %1662 = vmatprep.subr.mxu0 0.0
    %1663 = vmatpush1.msra.mxu0 %v1037
    %1664 = vmatprep.subr.mxu0 0.0
    %1665 = vmatpush1.msra.mxu0 0.0
    %1666 = vmatprep.subr.mxu0 0.0
    %1667 = vmatpush1.msra.mxu0 0.0
    %1668 = vmatprep.subr.mxu0 0.0
    %1669 = vmatpush1.msra.mxu0 0.0
    %1670 = vmatprep.subr.mxu0 0.0
    %1671 = vmatpush1.msra.mxu0 0.0
    %1672 = vmatprep.subr.mxu0 0.0
    %1673 = vmatpush1.msra.mxu0 0.0
    %1674 = vmatprep.subr.mxu0 0.0
    %1675 = vmatpush1.msra.mxu0 0.0
    %1676 = vmatprep.subr.mxu0 0.0
    %1677 = vmatpush1.msra.mxu0 0.0
    %1678 = vmatprep.subr.mxu0 0.0
    %1679 = vmatpush1.msra.mxu0 0.0
    %1680 = vmatprep.subr.mxu0 0.0
    %1681 = vmatpush1.msra.mxu0 0.0
    %1682 = vmatprep.subr.mxu0 0.0
    %1683 = vmatpush1.msra.mxu0 0.0
    %1684 = vmatprep.subr.mxu0 0.0
    %1685 = vmatpush1.msra.mxu0 0.0
    %1686 = vmatprep.subr.mxu0 0.0
    %1687 = vmatpush1.msra.mxu0 0.0
    %1688 = vmatprep.subr.mxu0 0.0
    %1689 = vmatpush1.msra.mxu0 0.0
    %1690 = vmatprep.subr.mxu0 0.0
    %1691 = vmatpush1.msra.mxu0 0.0
    %1692 = vmatprep.subr.mxu0 0.0
    %1693 = vmatpush1.msra.mxu0 0.0
    %1694 = vmatprep.subr.mxu0 0.0
    %1695 = vmatpush1.msra.mxu0 0.0
    %1696 = vmatprep.mubr.f32.mxu0 0.0
    %1697 = vmatmul.mubr.f32.gmra.mrb[0].mxu0 %v1561
    %v1698 = vpop.f32.mrb[0].mxu0
    %v1699 = vadd.f32 0.0, %v1698
    %v1700 = vpop.f32.mrb[0].mxu0
    %1701 = vdwg.mxu0
    %v1702 = vadd.f32 %v1629, %v1699
    %v1703 = vmul.f32 %v1702, %v78
    %v1704 = vtanh.pop %v1703
    %v1705 = vmul.f32 %v78, %v1704
    %v1706 = vadd.f32 %v1705, %v79
    %v1707 = vmul.f32 %v1706, %v1550
    %1709 = vrot.lane.b32.xlu0 %v1706, 96
    %v1710 = vpop.permute.xlu0 %1709
    %v1712 = vmul.f32 %v1706, %v1710
    %1714 = vrot.lane.b32.xlu0 %v1712, 16
    %v1715 = vpop.permute.xlu0 %1714
    %v1717 = vadd.f32 %v1707, %v1715
    %v1718 = vtanh.pop %v1717
    %1720 = vrot.lane.b32.xlu0 %v1718, 32
    %v1721 = vpop.permute.xlu0 %1720
    %v1723 = vmul.f32 %v1706, %v1721
    %1725 = vrot.lane.b32.xlu0 %v1723, 80
    %v1726 = vpop.permute.xlu0 %1725
    %v1728 = vsel %vm341, %v1726, 0.0
    %1729 = vmatprep.subr.mxu0 0.0
    %1730 = vmatpush1.msra.mxu0 %v1038
    %1731 = vmatprep.subr.mxu0 0.0
    %1732 = vmatpush1.msra.mxu0 %v1039
    %1733 = vmatprep.subr.mxu0 0.0
    %1734 = vmatpush1.msra.mxu0 %v1040
    %1735 = vmatprep.subr.mxu0 0.0
    %1736 = vmatpush1.msra.mxu0 %v1041
    %1737 = vmatprep.subr.mxu0 0.0
    %1738 = vmatpush1.msra.mxu0 %v1042
    %1739 = vmatprep.subr.mxu0 0.0
    %1740 = vmatpush1.msra.mxu0 %v1043
    %1741 = vmatprep.subr.mxu0 0.0
    %1742 = vmatpush1.msra.mxu0 %v1044
    %1743 = vmatprep.subr.mxu0 0.0
    %1744 = vmatpush1.msra.mxu0 %v1045
    %1745 = vmatprep.subr.mxu0 0.0
    %1746 = vmatpush1.msra.mxu0 %v1046
    %1747 = vmatprep.subr.mxu0 0.0
    %1748 = vmatpush1.msra.mxu0 %v1047
    %1749 = vmatprep.subr.mxu0 0.0
    %1750 = vmatpush1.msra.mxu0 %v1048
    %1751 = vmatprep.subr.mxu0 0.0
    %1752 = vmatpush1.msra.mxu0 %v1049
    %1753 = vmatprep.subr.mxu0 0.0
    %1754 = vmatpush1.msra.mxu0 %v1050
    %1755 = vmatprep.subr.mxu0 0.0
    %1756 = vmatpush1.msra.mxu0 %v1051
    %1757 = vmatprep.subr.mxu0 0.0
    %1758 = vmatpush1.msra.mxu0 %v1052
    %1759 = vmatprep.subr.mxu0 0.0
    %1760 = vmatpush1.msra.mxu0 %v1053
    %1761 = vmatprep.subr.mxu0 0.0
    %1762 = vmatpush1.msra.mxu0 0.0
    %1763 = vmatprep.subr.mxu0 0.0
    %1764 = vmatpush1.msra.mxu0 0.0
    %1765 = vmatprep.subr.mxu0 0.0
    %1766 = vmatpush1.msra.mxu0 0.0
    %1767 = vmatprep.subr.mxu0 0.0
    %1768 = vmatpush1.msra.mxu0 0.0
    %1769 = vmatprep.subr.mxu0 0.0
    %1770 = vmatpush1.msra.mxu0 0.0
    %1771 = vmatprep.subr.mxu0 0.0
    %1772 = vmatpush1.msra.mxu0 0.0
    %1773 = vmatprep.subr.mxu0 0.0
    %1774 = vmatpush1.msra.mxu0 0.0
    %1775 = vmatprep.subr.mxu0 0.0
    %1776 = vmatpush1.msra.mxu0 0.0
    %1777 = vmatprep.subr.mxu0 0.0
    %1778 = vmatpush1.msra.mxu0 0.0
    %1779 = vmatprep.subr.mxu0 0.0
    %1780 = vmatpush1.msra.mxu0 0.0
    %1781 = vmatprep.subr.mxu0 0.0
    %1782 = vmatpush1.msra.mxu0 0.0
    %1783 = vmatprep.subr.mxu0 0.0
    %1784 = vmatpush1.msra.mxu0 0.0
    %1785 = vmatprep.subr.mxu0 0.0
    %1786 = vmatpush1.msra.mxu0 0.0
    %1787 = vmatprep.subr.mxu0 0.0
    %1788 = vmatpush1.msra.mxu0 0.0
    %1789 = vmatprep.subr.mxu0 0.0
    %1790 = vmatpush1.msra.mxu0 0.0
    %1791 = vmatprep.subr.mxu0 0.0
    %1792 = vmatpush1.msra.mxu0 0.0
    %1793 = vmatprep.mubr.f32.mxu0 0.0
    %1794 = vmatmul.mubr.f32.gmra.mrb[0].mxu0 %v730
    %v1795 = vpop.f32.mrb[0].mxu0
    %v1796 = vadd.f32 %v1059, %v1795
    %v1797 = vpop.f32.mrb[0].mxu0
    %1798 = vdwg.mxu0
    %1799 = vmatprep.subr.mxu0 0.0
    %1800 = vmatpush1.msra.mxu0 %v1022
    %1801 = vmatprep.subr.mxu0 0.0
    %1802 = vmatpush1.msra.mxu0 %v1023
    %1803 = vmatprep.subr.mxu0 0.0
    %1804 = vmatpush1.msra.mxu0 %v1024
    %1805 = vmatprep.subr.mxu0 0.0
    %1806 = vmatpush1.msra.mxu0 %v1025
    %1807 = vmatprep.subr.mxu0 0.0
    %1808 = vmatpush1.msra.mxu0 %v1026
    %1809 = vmatprep.subr.mxu0 0.0
    %1810 = vmatpush1.msra.mxu0 %v1027
    %1811 = vmatprep.subr.mxu0 0.0
    %1812 = vmatpush1.msra.mxu0 %v1028
    %1813 = vmatprep.subr.mxu0 0.0
    %1814 = vmatpush1.msra.mxu0 %v1029
    %1815 = vmatprep.subr.mxu0 0.0
    %1816 = vmatpush1.msra.mxu0 %v1030
    %1817 = vmatprep.subr.mxu0 0.0
    %1818 = vmatpush1.msra.mxu0 %v1031
    %1819 = vmatprep.subr.mxu0 0.0
    %1820 = vmatpush1.msra.mxu0 %v1032
    %1821 = vmatprep.subr.mxu0 0.0
    %1822 = vmatpush1.msra.mxu0 %v1033
    %1823 = vmatprep.subr.mxu0 0.0
    %1824 = vmatpush1.msra.mxu0 %v1034
    %1825 = vmatprep.subr.mxu0 0.0
    %1826 = vmatpush1.msra.mxu0 %v1035
    %1827 = vmatprep.subr.mxu0 0.0
    %1828 = vmatpush1.msra.mxu0 %v1036
    %1829 = vmatprep.subr.mxu0 0.0
    %1830 = vmatpush1.msra.mxu0 %v1037
    %1831 = vmatprep.subr.mxu0 0.0
    %1832 = vmatpush1.msra.mxu0 0.0
    %1833 = vmatprep.subr.mxu0 0.0
    %1834 = vmatpush1.msra.mxu0 0.0
    %1835 = vmatprep.subr.mxu0 0.0
    %1836 = vmatpush1.msra.mxu0 0.0
    %1837 = vmatprep.subr.mxu0 0.0
    %1838 = vmatpush1.msra.mxu0 0.0
    %1839 = vmatprep.subr.mxu0 0.0
    %1840 = vmatpush1.msra.mxu0 0.0
    %1841 = vmatprep.subr.mxu0 0.0
    %1842 = vmatpush1.msra.mxu0 0.0
    %1843 = vmatprep.subr.mxu0 0.0
    %1844 = vmatpush1.msra.mxu0 0.0
    %1845 = vmatprep.subr.mxu0 0.0
    %1846 = vmatpush1.msra.mxu0 0.0
    %1847 = vmatprep.subr.mxu0 0.0
    %1848 = vmatpush1.msra.mxu0 0.0
    %1849 = vmatprep.subr.mxu0 0.0
    %1850 = vmatpush1.msra.mxu0 0.0
    %1851 = vmatprep.subr.mxu0 0.0
    %1852 = vmatpush1.msra.mxu0 0.0
    %1853 = vmatprep.subr.mxu0 0.0
    %1854 = vmatpush1.msra.mxu0 0.0
    %1855 = vmatprep.subr.mxu0 0.0
    %1856 = vmatpush1.msra.mxu0 0.0
    %1857 = vmatprep.subr.mxu0 0.0
    %1858 = vmatpush1.msra.mxu0 0.0
    %1859 = vmatprep.subr.mxu0 0.0
    %1860 = vmatpush1.msra.mxu0 0.0
    %1861 = vmatprep.subr.mxu0 0.0
    %1862 = vmatpush1.msra.mxu0 0.0
    %1863 = vmatprep.mubr.f32.mxu0 0.0
    %1864 = vmatmul.mubr.f32.gmra.mrb[0].mxu0 %v1728
    %v1865 = vpop.f32.mrb[0].mxu0
    %v1866 = vadd.f32 0.0, %v1865
    %v1867 = vpop.f32.mrb[0].mxu0
    %1868 = vdwg.mxu0
    %v1869 = vadd.f32 %v1796, %v1866
    %v1870 = vmul.f32 %v1869, %v78
    %v1871 = vtanh.pop %v1870
    %v1872 = vmul.f32 %v78, %v1871
    %v1873 = vadd.f32 %v1872, %v79
    %v1874 = vmul.f32 %v1873, %v1717
    %1876 = vrot.lane.b32.xlu0 %v1873, 96
    %v1877 = vpop.permute.xlu0 %1876
    %v1879 = vmul.f32 %v1873, %v1877
    %1881 = vrot.lane.b32.xlu0 %v1879, 16
    %v1882 = vpop.permute.xlu0 %1881
    %v1884 = vadd.f32 %v1874, %v1882
    %v1885 = vtanh.pop %v1884
    %1887 = vrot.lane.b32.xlu0 %v1885, 32
    %v1888 = vpop.permute.xlu0 %1887
    %v1890 = vmul.f32 %v1873, %v1888
    %1892 = vrot.lane.b32.xlu0 %v1890, 80
    %v1893 = vpop.permute.xlu0 %1892
    %v1895 = vsel %vm341, %v1893, 0.0
    %1896 = vmatprep.subr.mxu0 0.0
    %1897 = vmatpush1.msra.mxu0 %v1038
    %1898 = vmatprep.subr.mxu0 0.0
    %1899 = vmatpush1.msra.mxu0 %v1039
    %1900 = vmatprep.subr.mxu0 0.0
    %1901 = vmatpush1.msra.mxu0 %v1040
    %1902 = vmatprep.subr.mxu0 0.0
    %1903 = vmatpush1.msra.mxu0 %v1041
    %1904 = vmatprep.subr.mxu0 0.0
    %1905 = vmatpush1.msra.mxu0 %v1042
    %1906 = vmatprep.subr.mxu0 0.0
    %1907 = vmatpush1.msra.mxu0 %v1043
    %1908 = vmatprep.subr.mxu0 0.0
    %1909 = vmatpush1.msra.mxu0 %v1044
    %1910 = vmatprep.subr.mxu0 0.0
    %1911 = vmatpush1.msra.mxu0 %v1045
    %1912 = vmatprep.subr.mxu0 0.0
    %1913 = vmatpush1.msra.mxu0 %v1046
    %1914 = vmatprep.subr.mxu0 0.0
    %1915 = vmatpush1.msra.mxu0 %v1047
    %1916 = vmatprep.subr.mxu0 0.0
    %1917 = vmatpush1.msra.mxu0 %v1048
    %1918 = vmatprep.subr.mxu0 0.0
    %1919 = vmatpush1.msra.mxu0 %v1049
    %1920 = vmatprep.subr.mxu0 0.0
    %1921 = vmatpush1.msra.mxu0 %v1050
    %1922 = vmatprep.subr.mxu0 0.0
    %1923 = vmatpush1.msra.mxu0 %v1051
    %1924 = vmatprep.subr.mxu0 0.0
    %1925 = vmatpush1.msra.mxu0 %v1052
    %1926 = vmatprep.subr.mxu0 0.0
    %1927 = vmatpush1.msra.mxu0 %v1053
    %1928 = vmatprep.subr.mxu0 0.0
    %1929 = vmatpush1.msra.mxu0 0.0
    %1930 = vmatprep.subr.mxu0 0.0
    %1931 = vmatpush1.msra.mxu0 0.0
    %1932 = vmatprep.subr.mxu0 0.0
    %1933 = vmatpush1.msra.mxu0 0.0
    %1934 = vmatprep.subr.mxu0 0.0
    %1935 = vmatpush1.msra.mxu0 0.0
    %1936 = vmatprep.subr.mxu0 0.0
    %1937 = vmatpush1.msra.mxu0 0.0
    %1938 = vmatprep.subr.mxu0 0.0
    %1939 = vmatpush1.msra.mxu0 0.0
    %1940 = vmatprep.subr.mxu0 0.0
    %1941 = vmatpush1.msra.mxu0 0.0
    %1942 = vmatprep.subr.mxu0 0.0
    %1943 = vmatpush1.msra.mxu0 0.0
    %1944 = vmatprep.subr.mxu0 0.0
    %1945 = vmatpush1.msra.mxu0 0.0
    %1946 = vmatprep.subr.mxu0 0.0
    %1947 = vmatpush1.msra.mxu0 0.0
    %1948 = vmatprep.subr.mxu0 0.0
    %1949 = vmatpush1.msra.mxu0 0.0
    %1950 = vmatprep.subr.mxu0 0.0
    %1951 = vmatpush1.msra.mxu0 0.0
    %1952 = vmatprep.subr.mxu0 0.0
    %1953 = vmatpush1.msra.mxu0 0.0
    %1954 = vmatprep.subr.mxu0 0.0
    %1955 = vmatpush1.msra.mxu0 0.0
    %1956 = vmatprep.subr.mxu0 0.0
    %1957 = vmatpush1.msra.mxu0 0.0
    %1958 = vmatprep.subr.mxu0 0.0
    %1959 = vmatpush1.msra.mxu0 0.0
    %1960 = vmatprep.mubr.f32.mxu0 0.0
    %1961 = vmatmul.mubr.f32.gmra.mrb[0].mxu0 %v827
    %v1962 = vpop.f32.mrb[0].mxu0
    %v1963 = vadd.f32 %v1059, %v1962
    %v1964 = vpop.f32.mrb[0].mxu0
    %1965 = vdwg.mxu0
    %1966 = vmatprep.subr.mxu0 0.0
    %1967 = vmatpush1.msra.mxu0 %v1022
    %1968 = vmatprep.subr.mxu0 0.0
    %1969 = vmatpush1.msra.mxu0 %v1023
    %1970 = vmatprep.subr.mxu0 0.0
    %1971 = vmatpush1.msra.mxu0 %v1024
    %1972 = vmatprep.subr.mxu0 0.0
    %1973 = vmatpush1.msra.mxu0 %v1025
    %1974 = vmatprep.subr.mxu0 0.0
    %1975 = vmatpush1.msra.mxu0 %v1026
    %1976 = vmatprep.subr.mxu0 0.0
    %1977 = vmatpush1.msra.mxu0 %v1027
    %1978 = vmatprep.subr.mxu0 0.0
    %1979 = vmatpush1.msra.mxu0 %v1028
    %1980 = vmatprep.subr.mxu0 0.0
    %1981 = vmatpush1.msra.mxu0 %v1029
    %1982 = vmatprep.subr.mxu0 0.0
    %1983 = vmatpush1.msra.mxu0 %v1030
    %1984 = vmatprep.subr.mxu0 0.0
    %1985 = vmatpush1.msra.mxu0 %v1031
    %1986 = vmatprep.subr.mxu0 0.0
    %1987 = vmatpush1.msra.mxu0 %v1032
    %1988 = vmatprep.subr.mxu0 0.0
    %1989 = vmatpush1.msra.mxu0 %v1033
    %1990 = vmatprep.subr.mxu0 0.0
    %1991 = vmatpush1.msra.mxu0 %v1034
    %1992 = vmatprep.subr.mxu0 0.0
    %1993 = vmatpush1.msra.mxu0 %v1035
    %1994 = vmatprep.subr.mxu0 0.0
    %1995 = vmatpush1.msra.mxu0 %v1036
    %1996 = vmatprep.subr.mxu0 0.0
    %1997 = vmatpush1.msra.mxu0 %v1037
    %1998 = vmatprep.subr.mxu0 0.0
    %1999 = vmatpush1.msra.mxu0 0.0
    %2000 = vmatprep.subr.mxu0 0.0
    %2001 = vmatpush1.msra.mxu0 0.0
    %2002 = vmatprep.subr.mxu0 0.0
    %2003 = vmatpush1.msra.mxu0 0.0
    %2004 = vmatprep.subr.mxu0 0.0
    %2005 = vmatpush1.msra.mxu0 0.0
    %2006 = vmatprep.subr.mxu0 0.0
    %2007 = vmatpush1.msra.mxu0 0.0
    %2008 = vmatprep.subr.mxu0 0.0
    %2009 = vmatpush1.msra.mxu0 0.0
    %2010 = vmatprep.subr.mxu0 0.0
    %2011 = vmatpush1.msra.mxu0 0.0
    %2012 = vmatprep.subr.mxu0 0.0
    %2013 = vmatpush1.msra.mxu0 0.0
    %2014 = vmatprep.subr.mxu0 0.0
    %2015 = vmatpush1.msra.mxu0 0.0
    %2016 = vmatprep.subr.mxu0 0.0
    %2017 = vmatpush1.msra.mxu0 0.0
    %2018 = vmatprep.subr.mxu0 0.0
    %2019 = vmatpush1.msra.mxu0 0.0
    %2020 = vmatprep.subr.mxu0 0.0
    %2021 = vmatpush1.msra.mxu0 0.0
    %2022 = vmatprep.subr.mxu0 0.0
    %2023 = vmatpush1.msra.mxu0 0.0
    %2024 = vmatprep.subr.mxu0 0.0
    %2025 = vmatpush1.msra.mxu0 0.0
    %2026 = vmatprep.subr.mxu0 0.0
    %2027 = vmatpush1.msra.mxu0 0.0
    %2028 = vmatprep.subr.mxu0 0.0
    %2029 = vmatpush1.msra.mxu0 0.0
    %2030 = vmatprep.mubr.f32.mxu0 0.0
    %2031 = vmatmul.mubr.f32.gmra.mrb[0].mxu0 %v1895
    %v2032 = vpop.f32.mrb[0].mxu0
    %v2033 = vadd.f32 0.0, %v2032
    %v2034 = vpop.f32.mrb[0].mxu0
    %2035 = vdwg.mxu0
    %v2036 = vadd.f32 %v1963, %v2033
    %v2037 = vmul.f32 %v2036, %v78
    %v2038 = vtanh.pop %v2037
    %v2039 = vmul.f32 %v78, %v2038
    %v2040 = vadd.f32 %v2039, %v79
    %v2041 = vmul.f32 %v2040, %v1884
    %2043 = vrot.lane.b32.xlu0 %v2040, 96
    %v2044 = vpop.permute.xlu0 %2043
    %v2046 = vmul.f32 %v2040, %v2044
    %2048 = vrot.lane.b32.xlu0 %v2046, 16
    %v2049 = vpop.permute.xlu0 %2048
    %v2051 = vadd.f32 %v2041, %v2049
    %v2052 = vtanh.pop %v2051
    %2054 = vrot.lane.b32.xlu0 %v2052, 32
    %v2055 = vpop.permute.xlu0 %2054
    %v2057 = vmul.f32 %v2040, %v2055
    %2059 = vrot.lane.b32.xlu0 %v2057, 80
    %v2060 = vpop.permute.xlu0 %2059
    %v2062 = vsel %vm341, %v2060, 0.0
    %2063 = vmatprep.subr.mxu0 0.0
    %2064 = vmatpush1.msra.mxu0 %v1038
    %2065 = vmatprep.subr.mxu0 0.0
    %2066 = vmatpush1.msra.mxu0 %v1039
    %2067 = vmatprep.subr.mxu0 0.0
    %2068 = vmatpush1.msra.mxu0 %v1040
    %2069 = vmatprep.subr.mxu0 0.0
    %2070 = vmatpush1.msra.mxu0 %v1041
    %2071 = vmatprep.subr.mxu0 0.0
    %2072 = vmatpush1.msra.mxu0 %v1042
    %2073 = vmatprep.subr.mxu0 0.0
    %2074 = vmatpush1.msra.mxu0 %v1043
    %2075 = vmatprep.subr.mxu0 0.0
    %2076 = vmatpush1.msra.mxu0 %v1044
    %2077 = vmatprep.subr.mxu0 0.0
    %2078 = vmatpush1.msra.mxu0 %v1045
    %2079 = vmatprep.subr.mxu0 0.0
    %2080 = vmatpush1.msra.mxu0 %v1046
    %2081 = vmatprep.subr.mxu0 0.0
    %2082 = vmatpush1.msra.mxu0 %v1047
    %2083 = vmatprep.subr.mxu0 0.0
    %2084 = vmatpush1.msra.mxu0 %v1048
    %2085 = vmatprep.subr.mxu0 0.0
    %2086 = vmatpush1.msra.mxu0 %v1049
    %2087 = vmatprep.subr.mxu0 0.0
    %2088 = vmatpush1.msra.mxu0 %v1050
    %2089 = vmatprep.subr.mxu0 0.0
    %2090 = vmatpush1.msra.mxu0 %v1051
    %2091 = vmatprep.subr.mxu0 0.0
    %2092 = vmatpush1.msra.mxu0 %v1052
    %2093 = vmatprep.subr.mxu0 0.0
    %2094 = vmatpush1.msra.mxu0 %v1053
    %2095 = vmatprep.subr.mxu0 0.0
    %2096 = vmatpush1.msra.mxu0 0.0
    %2097 = vmatprep.subr.mxu0 0.0
    %2098 = vmatpush1.msra.mxu0 0.0
    %2099 = vmatprep.subr.mxu0 0.0
    %2100 = vmatpush1.msra.mxu0 0.0
    %2101 = vmatprep.subr.mxu0 0.0
    %2102 = vmatpush1.msra.mxu0 0.0
    %2103 = vmatprep.subr.mxu0 0.0
    %2104 = vmatpush1.msra.mxu0 0.0
    %2105 = vmatprep.subr.mxu0 0.0
    %2106 = vmatpush1.msra.mxu0 0.0
    %2107 = vmatprep.subr.mxu0 0.0
    %2108 = vmatpush1.msra.mxu0 0.0
    %2109 = vmatprep.subr.mxu0 0.0
    %2110 = vmatpush1.msra.mxu0 0.0
    %2111 = vmatprep.subr.mxu0 0.0
    %2112 = vmatpush1.msra.mxu0 0.0
    %2113 = vmatprep.subr.mxu0 0.0
    %2114 = vmatpush1.msra.mxu0 0.0
    %2115 = vmatprep.subr.mxu0 0.0
    %2116 = vmatpush1.msra.mxu0 0.0
    %2117 = vmatprep.subr.mxu0 0.0
    %2118 = vmatpush1.msra.mxu0 0.0
    %2119 = vmatprep.subr.mxu0 0.0
    %2120 = vmatpush1.msra.mxu0 0.0
    %2121 = vmatprep.subr.mxu0 0.0
    %2122 = vmatpush1.msra.mxu0 0.0
    %2123 = vmatprep.subr.mxu0 0.0
    %2124 = vmatpush1.msra.mxu0 0.0
    %2125 = vmatprep.subr.mxu0 0.0
    %2126 = vmatpush1.msra.mxu0 0.0
    %2127 = vmatprep.mubr.f32.mxu0 0.0
    %2128 = vmatmul.mubr.f32.gmra.mrb[0].mxu0 %v924
    %v2129 = vpop.f32.mrb[0].mxu0
    %v2130 = vadd.f32 %v1059, %v2129
    %v2131 = vpop.f32.mrb[0].mxu0
    %2132 = vdwg.mxu0
    %2133 = vmatprep.subr.mxu0 0.0
    %2134 = vmatpush1.msra.mxu0 %v1022
    %2135 = vmatprep.subr.mxu0 0.0
    %2136 = vmatpush1.msra.mxu0 %v1023
    %2137 = vmatprep.subr.mxu0 0.0
    %2138 = vmatpush1.msra.mxu0 %v1024
    %2139 = vmatprep.subr.mxu0 0.0
    %2140 = vmatpush1.msra.mxu0 %v1025
    %2141 = vmatprep.subr.mxu0 0.0
    %2142 = vmatpush1.msra.mxu0 %v1026
    %2143 = vmatprep.subr.mxu0 0.0
    %2144 = vmatpush1.msra.mxu0 %v1027
    %2145 = vmatprep.subr.mxu0 0.0
    %2146 = vmatpush1.msra.mxu0 %v1028
    %2147 = vmatprep.subr.mxu0 0.0
    %2148 = vmatpush1.msra.mxu0 %v1029
    %2149 = vmatprep.subr.mxu0 0.0
    %2150 = vmatpush1.msra.mxu0 %v1030
    %2151 = vmatprep.subr.mxu0 0.0
    %2152 = vmatpush1.msra.mxu0 %v1031
    %2153 = vmatprep.subr.mxu0 0.0
    %2154 = vmatpush1.msra.mxu0 %v1032
    %2155 = vmatprep.subr.mxu0 0.0
    %2156 = vmatpush1.msra.mxu0 %v1033
    %2157 = vmatprep.subr.mxu0 0.0
    %2158 = vmatpush1.msra.mxu0 %v1034
    %2159 = vmatprep.subr.mxu0 0.0
    %2160 = vmatpush1.msra.mxu0 %v1035
    %2161 = vmatprep.subr.mxu0 0.0
    %2162 = vmatpush1.msra.mxu0 %v1036
    %2163 = vmatprep.subr.mxu0 0.0
    %2164 = vmatpush1.msra.mxu0 %v1037
    %2165 = vmatprep.subr.mxu0 0.0
    %2166 = vmatpush1.msra.mxu0 0.0
    %2167 = vmatprep.subr.mxu0 0.0
    %2168 = vmatpush1.msra.mxu0 0.0
    %2169 = vmatprep.subr.mxu0 0.0
    %2170 = vmatpush1.msra.mxu0 0.0
    %2171 = vmatprep.subr.mxu0 0.0
    %2172 = vmatpush1.msra.mxu0 0.0
    %2173 = vmatprep.subr.mxu0 0.0
    %2174 = vmatpush1.msra.mxu0 0.0
    %2175 = vmatprep.subr.mxu0 0.0
    %2176 = vmatpush1.msra.mxu0 0.0
    %2177 = vmatprep.subr.mxu0 0.0
    %2178 = vmatpush1.msra.mxu0 0.0
    %2179 = vmatprep.subr.mxu0 0.0
    %2180 = vmatpush1.msra.mxu0 0.0
    %2181 = vmatprep.subr.mxu0 0.0
    %2182 = vmatpush1.msra.mxu0 0.0
    %2183 = vmatprep.subr.mxu0 0.0
    %2184 = vmatpush1.msra.mxu0 0.0
    %2185 = vmatprep.subr.mxu0 0.0
    %2186 = vmatpush1.msra.mxu0 0.0
    %2187 = vmatprep.subr.mxu0 0.0
    %2188 = vmatpush1.msra.mxu0 0.0
    %2189 = vmatprep.subr.mxu0 0.0
    %2190 = vmatpush1.msra.mxu0 0.0
    %2191 = vmatprep.subr.mxu0 0.0
    %2192 = vmatpush1.msra.mxu0 0.0
    %2193 = vmatprep.subr.mxu0 0.0
    %2194 = vmatpush1.msra.mxu0 0.0
    %2195 = vmatprep.subr.mxu0 0.0
    %2196 = vmatpush1.msra.mxu0 0.0
    %2197 = vmatprep.mubr.f32.mxu0 0.0
    %2198 = vmatmul.mubr.f32.gmra.mrb[0].mxu0 %v2062
    %v2199 = vpop.f32.mrb[0].mxu0
    %v2200 = vadd.f32 0.0, %v2199
    %v2201 = vpop.f32.mrb[0].mxu0
    %2202 = vdwg.mxu0
    %v2203 = vadd.f32 %v2130, %v2200
    %v2204 = vmul.f32 %v2203, %v78
    %v2205 = vtanh.pop %v2204
    %v2206 = vmul.f32 %v78, %v2205
    %v2207 = vadd.f32 %v2206, %v79
    %v2208 = vmul.f32 %v2207, %v2051
    %2210 = vrot.lane.b32.xlu0 %v2207, 96
    %v2211 = vpop.permute.xlu0 %2210
    %v2213 = vmul.f32 %v2207, %v2211
    %2215 = vrot.lane.b32.xlu0 %v2213, 16
    %v2216 = vpop.permute.xlu0 %2215
    %v2218 = vadd.f32 %v2208, %v2216
    %v2219 = vtanh.pop %v2218
    %2221 = vrot.lane.b32.xlu0 %v2219, 32
    %v2222 = vpop.permute.xlu0 %2221
    %v2224 = vmul.f32 %v2207, %v2222
    %2226 = vrot.lane.b32.xlu0 %v2224, 80
    %v2227 = vpop.permute.xlu0 %2226
    %v2229 = vsel %vm341, %v2227, 0.0
    %2230 = vmatprep.subr.mxu0 0.0
    %2231 = vmatpush1.msra.mxu0 %v1038
    %2232 = vmatprep.subr.mxu0 0.0
    %2233 = vmatpush1.msra.mxu0 %v1039
    %2234 = vmatprep.subr.mxu0 0.0
    %2235 = vmatpush1.msra.mxu0 %v1040
    %2236 = vmatprep.subr.mxu0 0.0
    %2237 = vmatpush1.msra.mxu0 %v1041
    %2238 = vmatprep.subr.mxu0 0.0
    %2239 = vmatpush1.msra.mxu0 %v1042
    %2240 = vmatprep.subr.mxu0 0.0
    %2241 = vmatpush1.msra.mxu0 %v1043
    %2242 = vmatprep.subr.mxu0 0.0
    %2243 = vmatpush1.msra.mxu0 %v1044
    %2244 = vmatprep.subr.mxu0 0.0
    %2245 = vmatpush1.msra.mxu0 %v1045
    %2246 = vmatprep.subr.mxu0 0.0
    %2247 = vmatpush1.msra.mxu0 %v1046
    %2248 = vmatprep.subr.mxu0 0.0
    %2249 = vmatpush1.msra.mxu0 %v1047
    %2250 = vmatprep.subr.mxu0 0.0
    %2251 = vmatpush1.msra.mxu0 %v1048
    %2252 = vmatprep.subr.mxu0 0.0
    %2253 = vmatpush1.msra.mxu0 %v1049
    %2254 = vmatprep.subr.mxu0 0.0
    %2255 = vmatpush1.msra.mxu0 %v1050
    %2256 = vmatprep.subr.mxu0 0.0
    %2257 = vmatpush1.msra.mxu0 %v1051
    %2258 = vmatprep.subr.mxu0 0.0
    %2259 = vmatpush1.msra.mxu0 %v1052
    %2260 = vmatprep.subr.mxu0 0.0
    %2261 = vmatpush1.msra.mxu0 %v1053
    %2262 = vmatprep.subr.mxu0 0.0
    %2263 = vmatpush1.msra.mxu0 0.0
    %2264 = vmatprep.subr.mxu0 0.0
    %2265 = vmatpush1.msra.mxu0 0.0
    %2266 = vmatprep.subr.mxu0 0.0
    %2267 = vmatpush1.msra.mxu0 0.0
    %2268 = vmatprep.subr.mxu0 0.0
    %2269 = vmatpush1.msra.mxu0 0.0
    %2270 = vmatprep.subr.mxu0 0.0
    %2271 = vmatpush1.msra.mxu0 0.0
    %2272 = vmatprep.subr.mxu0 0.0
    %2273 = vmatpush1.msra.mxu0 0.0
    %2274 = vmatprep.subr.mxu0 0.0
    %2275 = vmatpush1.msra.mxu0 0.0
    %2276 = vmatprep.subr.mxu0 0.0
    %2277 = vmatpush1.msra.mxu0 0.0
    %2278 = vmatprep.subr.mxu0 0.0
    %2279 = vmatpush1.msra.mxu0 0.0
    %2280 = vmatprep.subr.mxu0 0.0
    %2281 = vmatpush1.msra.mxu0 0.0
    %2282 = vmatprep.subr.mxu0 0.0
    %2283 = vmatpush1.msra.mxu0 0.0
    %2284 = vmatprep.subr.mxu0 0.0
    %2285 = vmatpush1.msra.mxu0 0.0
    %2286 = vmatprep.subr.mxu0 0.0
    %2287 = vmatpush1.msra.mxu0 0.0
    %2288 = vmatprep.subr.mxu0 0.0
    %2289 = vmatpush1.msra.mxu0 0.0
    %2290 = vmatprep.subr.mxu0 0.0
    %2291 = vmatpush1.msra.mxu0 0.0
    %2292 = vmatprep.subr.mxu0 0.0
    %2293 = vmatpush1.msra.mxu0 0.0
    %2294 = vmatprep.mubr.f32.mxu0 0.0
    %2295 = vmatmul.mubr.f32.gmra.mrb[0].mxu0 %v1021
    %v2296 = vpop.f32.mrb[0].mxu0
    %v2297 = vadd.f32 %v1059, %v2296
    %v2298 = vpop.f32.mrb[0].mxu0
    %2299 = vdwg.mxu0
    %2300 = vmatprep.subr.mxu0 0.0
    %2301 = vmatpush1.msra.mxu0 %v1022
    %2302 = vmatprep.subr.mxu0 0.0
    %2303 = vmatpush1.msra.mxu0 %v1023
    %2304 = vmatprep.subr.mxu0 0.0
    %2305 = vmatpush1.msra.mxu0 %v1024
    %2306 = vmatprep.subr.mxu0 0.0
    %2307 = vmatpush1.msra.mxu0 %v1025
    %2308 = vmatprep.subr.mxu0 0.0
    %2309 = vmatpush1.msra.mxu0 %v1026
    %2310 = vmatprep.subr.mxu0 0.0
    %2311 = vmatpush1.msra.mxu0 %v1027
    %2312 = vmatprep.subr.mxu0 0.0
    %2313 = vmatpush1.msra.mxu0 %v1028
    %2314 = vmatprep.subr.mxu0 0.0
    %2315 = vmatpush1.msra.mxu0 %v1029
    %2316 = vmatprep.subr.mxu0 0.0
    %2317 = vmatpush1.msra.mxu0 %v1030
    %2318 = vmatprep.subr.mxu0 0.0
    %2319 = vmatpush1.msra.mxu0 %v1031
    %2320 = vmatprep.subr.mxu0 0.0
    %2321 = vmatpush1.msra.mxu0 %v1032
    %2322 = vmatprep.subr.mxu0 0.0
    %2323 = vmatpush1.msra.mxu0 %v1033
    %2324 = vmatprep.subr.mxu0 0.0
    %2325 = vmatpush1.msra.mxu0 %v1034
    %2326 = vmatprep.subr.mxu0 0.0
    %2327 = vmatpush1.msra.mxu0 %v1035
    %2328 = vmatprep.subr.mxu0 0.0
    %2329 = vmatpush1.msra.mxu0 %v1036
    %2330 = vmatprep.subr.mxu0 0.0
    %2331 = vmatpush1.msra.mxu0 %v1037
    %2332 = vmatprep.subr.mxu0 0.0
    %2333 = vmatpush1.msra.mxu0 0.0
    %2334 = vmatprep.subr.mxu0 0.0
    %2335 = vmatpush1.msra.mxu0 0.0
    %2336 = vmatprep.subr.mxu0 0.0
    %2337 = vmatpush1.msra.mxu0 0.0
    %2338 = vmatprep.subr.mxu0 0.0
    %2339 = vmatpush1.msra.mxu0 0.0
    %2340 = vmatprep.subr.mxu0 0.0
    %2341 = vmatpush1.msra.mxu0 0.0
    %2342 = vmatprep.subr.mxu0 0.0
    %2343 = vmatpush1.msra.mxu0 0.0
    %2344 = vmatprep.subr.mxu0 0.0
    %2345 = vmatpush1.msra.mxu0 0.0
    %2346 = vmatprep.subr.mxu0 0.0
    %2347 = vmatpush1.msra.mxu0 0.0
    %2348 = vmatprep.subr.mxu0 0.0
    %2349 = vmatpush1.msra.mxu0 0.0
    %2350 = vmatprep.subr.mxu0 0.0
    %2351 = vmatpush1.msra.mxu0 0.0
    %2352 = vmatprep.subr.mxu0 0.0
    %2353 = vmatpush1.msra.mxu0 0.0
    %2354 = vmatprep.subr.mxu0 0.0
    %2355 = vmatpush1.msra.mxu0 0.0
    %2356 = vmatprep.subr.mxu0 0.0
    %2357 = vmatpush1.msra.mxu0 0.0
    %2358 = vmatprep.subr.mxu0 0.0
    %2359 = vmatpush1.msra.mxu0 0.0
    %2360 = vmatprep.subr.mxu0 0.0
    %2361 = vmatpush1.msra.mxu0 0.0
    %2362 = vmatprep.subr.mxu0 0.0
    %2363 = vmatpush1.msra.mxu0 0.0
    %2364 = vmatprep.mubr.f32.mxu0 0.0
    %2365 = vmatmul.mubr.f32.gmra.mrb[0].mxu0 %v2229
    %v2366 = vpop.f32.mrb[0].mxu0
    %v2367 = vadd.f32 0.0, %v2366
    %v2368 = vpop.f32.mrb[0].mxu0
    %2369 = vdwg.mxu0
    %v2370 = vadd.f32 %v2297, %v2367
    %v2371 = vmul.f32 %v2370, %v78
    %v2372 = vtanh.pop %v2371
    %v2373 = vmul.f32 %v78, %v2372
    %v2374 = vadd.f32 %v2373, %v79
    %v2375 = vmul.f32 %v2374, %v2218
    %2377 = vrot.lane.b32.xlu0 %v2374, 96
    %v2378 = vpop.permute.xlu0 %2377
    %v2380 = vmul.f32 %v2374, %v2378
    %2382 = vrot.lane.b32.xlu0 %v2380, 16
    %v2383 = vpop.permute.xlu0 %2382
    %v2385 = vadd.f32 %v2375, %v2383
    %v2386 = vtanh.pop %v2385
    %2388 = vrot.lane.b32.xlu0 %v2386, 32
    %v2389 = vpop.permute.xlu0 %2388
    %v2391 = vmul.f32 %v2374, %v2389
    %2393 = vrot.lane.b32.xlu0 %v2391, 80
    %v2394 = vpop.permute.xlu0 %2393
    %v2396 = vsel %vm341, %v2394, 0.0
    %v2397 = vld [vmem:[#allocation6] sm:$0xff]
    %v2398 = vld [vmem:[#allocation6 + $0x8] sm:$0xff]
    %v2399 = vld [vmem:[#allocation6 + $0x10] sm:$0xff]
    %v2400 = vld [vmem:[#allocation6 + $0x18] sm:$0xff]
    %v2401 = vld [vmem:[#allocation6 + $0x20] sm:$0xff]
    %v2402 = vld [vmem:[#allocation6 + $0x28] sm:$0xff]
    %v2403 = vld [vmem:[#allocation6 + $0x30] sm:$0xff]
    %v2404 = vld [vmem:[#allocation6 + $0x38] sm:$0xff]
    %v2405 = vld [vmem:[#allocation6 + $0x40] sm:$0xff]
    %v2406 = vld [vmem:[#allocation6 + $0x48] sm:$0xff]
    %v2407 = vld [vmem:[#allocation6 + $0x50] sm:$0xff]
    %v2408 = vld [vmem:[#allocation6 + $0x58] sm:$0xff]
    %v2409 = vld [vmem:[#allocation6 + $0x60] sm:$0xff]
    %v2410 = vld [vmem:[#allocation6 + $0x68] sm:$0xff]
    %v2411 = vld [vmem:[#allocation6 + $0x70] sm:$0xff]
    %v2412 = vld [vmem:[#allocation6 + $0x78] sm:$0xff]
    %v2413 = vld [vmem:[%s8] sm:$0x1]
    %v2415 = vlaneseq
    %v2416 = vshrl.u32 %v2415, 7
    %v2417 = vsub.s32 0, %v2416
    %v2418 = vrot.slane %v2413, %v2417
    %2420 = vmatprep.subr.mxu0 0.0
    %2421 = vmatpush1.msra.mxu0 %v2397
    %2422 = vmatprep.subr.mxu0 0.0
    %2423 = vmatpush1.msra.mxu0 %v2398
    %2424 = vmatprep.subr.mxu0 0.0
    %2425 = vmatpush1.msra.mxu0 %v2399
    %2426 = vmatprep.subr.mxu0 0.0
    %2427 = vmatpush1.msra.mxu0 %v2400
    %2428 = vmatprep.subr.mxu0 0.0
    %2429 = vmatpush1.msra.mxu0 %v2401
    %2430 = vmatprep.subr.mxu0 0.0
    %2431 = vmatpush1.msra.mxu0 %v2402
    %2432 = vmatprep.subr.mxu0 0.0
    %2433 = vmatpush1.msra.mxu0 %v2403
    %2434 = vmatprep.subr.mxu0 0.0
    %2435 = vmatpush1.msra.mxu0 %v2404
    %2436 = vmatprep.subr.mxu0 0.0
    %2437 = vmatpush1.msra.mxu0 %v2405
    %2438 = vmatprep.subr.mxu0 0.0
    %2439 = vmatpush1.msra.mxu0 %v2406
    %2440 = vmatprep.subr.mxu0 0.0
    %2441 = vmatpush1.msra.mxu0 %v2407
    %2442 = vmatprep.subr.mxu0 0.0
    %2443 = vmatpush1.msra.mxu0 %v2408
    %2444 = vmatprep.subr.mxu0 0.0
    %2445 = vmatpush1.msra.mxu0 %v2409
    %2446 = vmatprep.subr.mxu0 0.0
    %2447 = vmatpush1.msra.mxu0 %v2410
    %2448 = vmatprep.subr.mxu0 0.0
    %2449 = vmatpush1.msra.mxu0 %v2411
    %2450 = vmatprep.subr.mxu0 0.0
    %2451 = vmatpush1.msra.mxu0 %v2412
    %2452 = vmatprep.subr.mxu0 0.0
    %2453 = vmatpush1.msra.mxu0 0.0
    %2454 = vmatprep.subr.mxu0 0.0
    %2455 = vmatpush1.msra.mxu0 0.0
    %2456 = vmatprep.subr.mxu0 0.0
    %2457 = vmatpush1.msra.mxu0 0.0
    %2458 = vmatprep.subr.mxu0 0.0
    %2459 = vmatpush1.msra.mxu0 0.0
    %2460 = vmatprep.subr.mxu0 0.0
    %2461 = vmatpush1.msra.mxu0 0.0
    %2462 = vmatprep.subr.mxu0 0.0
    %2463 = vmatpush1.msra.mxu0 0.0
    %2464 = vmatprep.subr.mxu0 0.0
    %2465 = vmatpush1.msra.mxu0 0.0
    %2466 = vmatprep.subr.mxu0 0.0
    %2467 = vmatpush1.msra.mxu0 0.0
    %2468 = vmatprep.subr.mxu0 0.0
    %2469 = vmatpush1.msra.mxu0 0.0
    %2470 = vmatprep.subr.mxu0 0.0
    %2471 = vmatpush1.msra.mxu0 0.0
    %2472 = vmatprep.subr.mxu0 0.0
    %2473 = vmatpush1.msra.mxu0 0.0
    %2474 = vmatprep.subr.mxu0 0.0
    %2475 = vmatpush1.msra.mxu0 0.0
    %2476 = vmatprep.subr.mxu0 0.0
    %2477 = vmatpush1.msra.mxu0 0.0
    %2478 = vmatprep.subr.mxu0 0.0
    %2479 = vmatpush1.msra.mxu0 0.0
    %2480 = vmatprep.subr.mxu0 0.0
    %2481 = vmatpush1.msra.mxu0 0.0
    %2482 = vmatprep.subr.mxu0 0.0
    %2483 = vmatpush1.msra.mxu0 0.0
    %2484 = vmatprep.mubr.f32.mxu0 0.0
    %2485 = vmatmul.mubr.f32.gmra.mrb[0].mxu0 %v2396
    %v2486 = vpop.f32.mrb[0].mxu0
    %v2487 = vadd.f32 %v2418, %v2486
    %v2488 = vpop.f32.mrb[0].mxu0
    %2489 = vdwg.mxu0
    %v2490 = vtanh.pop %v2487
    %2491 = vst [vmem:[%s9] sm:$0xff] %v2490
    // Predicated region
    $region50: #{pinn_forward.1} parent=1 // pred_check
      _
    $region51: #{pinn_forward.1} parent=1 // pred_check_branch
      %2493 = sbr.rel (0) target = $region53
    $region52: #{pinn_forward.1} parent=1 // pred_region
      _
    $region53: #{pinn_forward.1} parent=1 // pred_fallthru
      _
    // Predicated region
    $region54: #{pinn_forward.1} parent=1 // pred_check
      _
    $region55: #{pinn_forward.1} parent=1 // pred_check_branch
      %2495 = sbr.rel (0) target = $region57
    $region56: #{pinn_forward.1} parent=1 // pred_region
      _
    $region57: #{pinn_forward.1} parent=1 // pred_fallthru
      _
    %2496 = vsyncpa [#allocation3], 1
    %2497 = vsyncpa [#allocation5], 1

</llo_original>
